<compile_context>
chip_gen: v5e
topology: v5e:2x2
jax: 0.10.0
libtpu: 0.0.40
codegen_flags: <defaults>
</compile_context>

<pallas_src>
import functools
import math

import jax
import jax.numpy as jnp
from jax.experimental import pallas as pl
from jax.experimental.pallas import tpu as pltpu


# --------------------------- in-kernel helpers ------------------------------

def _mm(a, w):
    """a @ w; operands fed to the MXU as bf16, f32 accumulation.

    Weights are pre-cast to bf16 on the host, so .astype is a no-op for them;
    activation operands (f32) get the single required cast here.
    """
    return jax.lax.dot_general(
        a.astype(jnp.bfloat16), w.astype(jnp.bfloat16),
        (((1,), (0,)), ((), ())),
        preferred_element_type=jnp.float32)


def _mm_t(a, b):
    """a @ b.T (contract last dims of both) without an explicit transpose."""
    return jax.lax.dot_general(
        a.astype(jnp.bfloat16), b.astype(jnp.bfloat16),
        (((1,), (1,)), ((), ())),
        preferred_element_type=jnp.float32)


def _softmax_rows(x):
    """Row softmax, f32 epilogue, approx reciprocal on the EUP."""
    m = jnp.max(x, axis=-1, keepdims=True)
    e = jnp.exp(x - m)
    return e * pl.reciprocal(jnp.sum(e, axis=-1, keepdims=True), approx=True)


def _round_up(x, m):
    return (x + m - 1) // m * m


def _slab_layout(S, T, E, C, iter_size):
    """Column layout of the lane-dense output slab (per batch element)."""
    col_bb = 0                         # backbone feature (rows 0:S, width E)
    col_vis = E                        # [v_feature | v_scores | v_logits]
    vis_w = E + S + C
    col_iter0 = _round_up(col_vis + vis_w, 128)   # per-iteration sections
    iter_w = E + 2 * C                 # [l_feature | l_logits | a_logits]
    iter_stride = _round_up(iter_w, 64)
    width = _round_up(col_iter0 + iter_size * iter_stride, 128)
    rows = _round_up(max(S, T), 8)
    return dict(col_bb=col_bb, col_vis=col_vis, vis_w=vis_w,
                col_iter0=col_iter0, iter_w=iter_w, iter_stride=iter_stride,
                rows=rows, width=width)


# ------------------------------ fused kernel --------------------------------

def _matrn_kernel(
        x_ref,
        stem_w_ref, stem_b_ref,
        v_pos_q_ref, v_kv_w_ref, v_kv_b_ref, v_cls_w_ref, v_cls_b_ref,
        l_proj_w_ref, l_proj_b_ref, l_tok_pe_ref, l_pos_q_ref,
        l_cls_w_ref, l_cls_b_ref,
        sv_pos_t_ref, sv_pos_s_ref, sv_g_w_ref, sv_g_b_ref,
        sv_cls_w_ref, sv_cls_b_ref,
        out_ref,
        *, scale, iter_size, max_length, S, T, E, C, lay):
    # Deterministic output: zero the slab once (dense store), then overwrite
    # the used sections.
    out_ref[...] = jnp.zeros(out_ref.shape, out_ref.dtype)

    # ------------------------------- vision --------------------------------
    x = x_ref[0]                                                 # (S, P) f32
    bb = jnp.maximum(_mm(x, stem_w_ref[...]) + stem_b_ref[...], 0.0)    # (S,E)
    kv = _mm(bb, v_kv_w_ref[...]) + v_kv_b_ref[...]              # (S, 2E)
    k = kv[:, :E]
    v = kv[:, E:]
    s = _mm_t(v_pos_q_ref[...], k) * scale                       # (T, S)
    v_scores = _softmax_rows(s)                                  # attn probs
    v_feat = _mm(v_scores, v)                                    # (T, E)
    v_logits = _mm(v_feat, v_cls_w_ref[...]) + v_cls_b_ref[...]  # (T, C)

    out_ref[0, 0:S, lay['col_bb']:lay['col_bb'] + E] = bb
    cv = lay['col_vis']
    out_ref[0, 0:T, cv:cv + lay['vis_w']] = jnp.concatenate(
        [v_feat, v_scores, v_logits], axis=-1)

    # Masks reused by every language iteration.
    row = jax.lax.broadcasted_iota(jnp.int32, (T, T), 0)
    col = jax.lax.broadcasted_iota(jnp.int32, (T, T), 1)
    diag_neg = jnp.where(row == col, -1e9, 0.0)   # BCN location mask

    prev_logits = v_logits
    for it in range(iter_size):
        # ---- pt_length of previous stage, clipped to [2, max_length] ------
        pmax = jnp.max(prev_logits, axis=-1, keepdims=True)      # (T, 1)
        is_null = prev_logits[:, 0:1] >= pmax                    # argmax == 0
        pos1 = jax.lax.broadcasted_iota(jnp.int32, (T, 1), 0) + 1
        length = jnp.min(jnp.where(is_null, pos1, max_length),
                         axis=0, keepdims=True)                  # (1, 1) i32
        length = jnp.clip(length, 2, max_length)

        # --------------------------- language ------------------------------
        tokens = _softmax_rows(prev_logits)                      # (T, C)
        embed = (_mm(tokens, l_proj_w_ref[...]) + l_proj_b_ref[...]
                 + l_tok_pe_ref[...])                            # (T, E)
        sl = _mm_t(l_pos_q_ref[...], embed) * scale              # (T, T)
        sl = sl + jnp.where(col < length, 0.0, -1e9) + diag_neg
        p_lang = _softmax_rows(sl)
        l_feat = _mm(p_lang, embed)                              # (T, E)
        l_logits = _mm(l_feat, l_cls_w_ref[...]) + l_cls_b_ref[...]

        # ---------------------- semantic-visual fusion ---------------------
        a_feat = _mm(v_scores, bb)                               # aligned visual
        q2 = l_feat + sv_pos_t_ref[...]
        k2 = bb + sv_pos_s_ref[...]
        p2 = _softmax_rows(_mm_t(q2, k2) * scale)                # (T, S)
        a_feat = a_feat + _mm(p2, bb)
        gate = jax.nn.sigmoid(
            _mm(jnp.concatenate([l_feat, a_feat], axis=-1), sv_g_w_ref[...])
            + sv_g_b_ref[...])                                   # (T, E)
        fused = gate * l_feat + (1.0 - gate) * a_feat
        a_logits = _mm(fused, sv_cls_w_ref[...]) + sv_cls_b_ref[...]

        base = lay['col_iter0'] + it * lay['iter_stride']
        out_ref[0, 0:T, base:base + lay['iter_w']] = jnp.concatenate(
            [l_feat, l_logits, a_logits], axis=-1)

        prev_logits = a_logits


# ------------------------------ model pieces --------------------------------

def get_length(logits, max_length):
    """First position whose argmax is the null char (index 0), plus one."""
    null_hits = (jnp.argmax(logits, axis=-1) == 0)
    any_null = jnp.any(null_hits, axis=-1)
    first = jnp.argmax(null_hits.astype(jnp.int32), axis=-1) + 1
    return jnp.where(any_null, first, max_length).astype(jnp.int32)


def init_params(key, *, E, C, T, S, P):
    ks = jax.random.split(key, 12)

    def w(k, shape, dtype=jnp.bfloat16):
        # Matmul weights pre-cast to bf16 on the host (halves weight DMA and
        # removes per-iteration VPU casts); additive tables stay f32.
        return (jax.random.normal(k, shape, jnp.float32) * 0.02).astype(dtype)

    f32 = jnp.float32
    return {
        # --- BaseVision (patchify-linear stem + position attention) ---
        'stem_w': w(ks[0], (P, E)), 'stem_b': jnp.zeros((1, E), f32),
        'v_pos_q': w(ks[1], (T, E)),
        'v_kv_w': w(ks[2], (E, 2 * E)),          # merged K|V projection
        'v_kv_b': jnp.zeros((1, 2 * E), f32),
        'v_cls_w': w(ks[3], (E, C)), 'v_cls_b': jnp.zeros((1, C), f32),
        # --- BCNLanguage ---
        'l_proj_w': w(ks[4], (C, E)), 'l_proj_b': jnp.zeros((1, E), f32),
        'l_tok_pe': w(ks[5], (T, E), f32),
        'l_pos_q': w(ks[6], (T, E)),
        'l_cls_w': w(ks[7], (E, C)), 'l_cls_b': jnp.zeros((1, C), f32),
        # --- BaseSemanticVisual_backbone_feature ---
        'sv_pos_t': w(ks[8], (T, E), f32),
        'sv_pos_s': w(ks[9], (S, E), f32),
        'sv_g_w': w(ks[10], (2 * E, E)),         # merged gate projection
        'sv_g_b': jnp.zeros((1, E), f32),
        'sv_cls_w': w(ks[11], (E, C)), 'sv_cls_b': jnp.zeros((1, C), f32),
    }


# Semantic-visual config (decides which optional inputs MATRN.forward passes)
SV_PE = 'attention'     # 'attention' in pe -> vision attn scores are used
SV_MASK = 'none'        # not a semantic_dropout variant -> no l_logits / texts


def matrn_forward(params, images, texts, *, iter_size=1, max_length=9,
                  training=False, test_bh=None, patch=4):
    # TODO(synk): original uses a ResNet-45 backbone + multi-layer
    # transformers; a patchify+linear stem and single attention layer per
    # module are implemented here.
    del texts  # only used by the semantic_dropout_adv1 variant (SV_MASK='none')
    T = max_length
    N, Cin, H, W = images.shape
    h, w = H // patch, W // patch
    S = h * w
    P = Cin * patch * patch
    x = images.reshape(N, Cin, h, patch, w, patch)
    x = x.transpose(0, 2, 4, 1, 3, 5).reshape(N, S, P)

    E = params['stem_b'].shape[-1]
    C = params['v_cls_b'].shape[-1]
    scale = 1.0 / math.sqrt(E)
    lay = _slab_layout(S, T, E, C, iter_size)

    weight_args = [
        params['stem_w'], params['stem_b'],
        params['v_pos_q'], params['v_kv_w'], params['v_kv_b'],
        params['v_cls_w'], params['v_cls_b'],
        params['l_proj_w'], params['l_proj_b'], params['l_tok_pe'],
        params['l_pos_q'], params['l_cls_w'], params['l_cls_b'],
        params['sv_pos_t'], params['sv_pos_s'],
        params['sv_g_w'], params['sv_g_b'],
        params['sv_cls_w'], params['sv_cls_b'],
    ]
    in_specs = [pl.BlockSpec((1, S, P), lambda b: (b, 0, 0))]
    in_specs += [pl.BlockSpec(w_.shape, lambda b: (0, 0)) for w_ in weight_args]

    kernel = functools.partial(
        _matrn_kernel, scale=scale, iter_size=iter_size,
        max_length=max_length, S=S, T=T, E=E, C=C, lay=lay)

    # Note: VMEM use is tiny at these shapes; at real MATRN sizes set
    # pltpu.CompilerParams(vmem_limit_bytes=...) explicitly for v7x's 64 MiB.
    slab = pl.pallas_call(
        kernel,
        grid=(N,),
        in_specs=in_specs,
        out_specs=pl.BlockSpec((1, lay['rows'], lay['width']),
                               lambda b: (b, 0, 0)),
        out_shape=jax.ShapeDtypeStruct((N, lay['rows'], lay['width']),
                                       jnp.float32),
        compiler_params=pltpu.CompilerParams(
            dimension_semantics=("parallel",)),
    )(x, *weight_args)

    # ---------------------------- host unpack ------------------------------
    backbone = slab[:, :S, lay['col_bb']:lay['col_bb'] + E]
    cv = lay['col_vis']
    v_feature = slab[:, :T, cv:cv + E]
    v_scores = slab[:, :T, cv + E:cv + E + S]
    v_logits = slab[:, :T, cv + E + S:cv + E + S + C]
    v_res = {'feature': v_feature, 'logits': v_logits,
             'pt_lengths': get_length(v_logits, max_length),
             'attn_scores': v_scores, 'backbone_feature': backbone,
             'loss_weight': 1.0, 'name': 'vision'}

    all_l_res, all_a_res = [], []
    for it in range(iter_size):
        b0 = lay['col_iter0'] + it * lay['iter_stride']
        l_feat = slab[:, :T, b0:b0 + E]
        l_logits = slab[:, :T, b0 + E:b0 + E + C]
        a_logits = slab[:, :T, b0 + E + C:b0 + E + 2 * C]
        all_l_res.append({'feature': l_feat, 'logits': l_logits,
                          'pt_lengths': get_length(l_logits, max_length),
                          'loss_weight': 1.0, 'name': 'language'})
        all_a_res.append({'logits': a_logits,
                          'pt_lengths': get_length(a_logits, max_length),
                          'loss_weight': 1.0, 'name': 'alignment'})
    a_res = all_a_res[-1]

    if training:
        return all_a_res, all_l_res, v_res
    if test_bh is None or test_bh == 'final':
        return a_res, all_l_res[-1], v_res
    if test_bh == 'semantic':
        return all_a_res[-2], all_l_res[-1], v_res
    if test_bh == 'visual':
        return all_a_res[-3], all_l_res[-1], v_res
    raise NotImplementedError


# ----------------------------------- main -----------------------------------

if __name__ == "__main__":
    key = jax.random.PRNGKey(0)
    pkey, ikey, tkey = jax.random.split(key, 3)

    # small shapes: dataset_max_length = 8 -> max_length T = 9
    E, C, T, patch = 32, 8, 9, 4
    N, Cin, H, W = 2, 3, 8, 32
    S = (H // patch) * (W // patch)          # 16 visual tokens
    P = Cin * patch * patch                  # 48 patch dims

    params = init_params(pkey, E=E, C=C, T=T, S=S, P=P)
    images = jax.random.normal(ikey, (N, Cin, H, W), jnp.float32)   # NCHW
    gt_text = jax.random.randint(tkey, (N, T), 0, C)

    a_res, l_res, v_res = matrn_forward(params, images, (gt_text,),
                                        iter_size=1, max_length=T, patch=patch)

    jax.block_until_ready(a_res['logits'])
    jax.block_until_ready(l_res['logits'])
    jax.block_until_ready(v_res['logits'])

    assert a_res['logits'].shape == (N, T, C)
    assert l_res['logits'].shape == (N, T, C)
    assert v_res['logits'].shape == (N, T, C)
    assert v_res['attn_scores'].shape == (N, T, S)
    assert v_res['backbone_feature'].shape == (N, S, E)
    assert a_res['pt_lengths'].shape == (N,)
    print("KERNEL_OK")
</pallas_src>

<mosaic_0001>
module attributes {stable_mosaic.version = 11 : i64} {
  func.func @_matrn_kernel(%arg0: i32, %arg1: memref<1x16x48xf32, #tpu.memory_space<vmem>>, %arg2: memref<48x32xbf16, #tpu.memory_space<vmem>>, %arg3: memref<1x32xf32, #tpu.memory_space<vmem>>, %arg4: memref<9x32xbf16, #tpu.memory_space<vmem>>, %arg5: memref<32x64xbf16, #tpu.memory_space<vmem>>, %arg6: memref<1x64xf32, #tpu.memory_space<vmem>>, %arg7: memref<32x8xbf16, #tpu.memory_space<vmem>>, %arg8: memref<1x8xf32, #tpu.memory_space<vmem>>, %arg9: memref<8x32xbf16, #tpu.memory_space<vmem>>, %arg10: memref<1x32xf32, #tpu.memory_space<vmem>>, %arg11: memref<9x32xf32, #tpu.memory_space<vmem>>, %arg12: memref<9x32xbf16, #tpu.memory_space<vmem>>, %arg13: memref<32x8xbf16, #tpu.memory_space<vmem>>, %arg14: memref<1x8xf32, #tpu.memory_space<vmem>>, %arg15: memref<9x32xf32, #tpu.memory_space<vmem>>, %arg16: memref<16x32xf32, #tpu.memory_space<vmem>>, %arg17: memref<64x32xbf16, #tpu.memory_space<vmem>>, %arg18: memref<1x32xf32, #tpu.memory_space<vmem>>, %arg19: memref<32x8xbf16, #tpu.memory_space<vmem>>, %arg20: memref<1x8xf32, #tpu.memory_space<vmem>>, %arg21: memref<1x16x256xf32, #tpu.memory_space<vmem>>) attributes {dimension_semantics = [#tpu.dimension_semantics<parallel>], iteration_bounds = array<i64: 2>, scalar_prefetch = 0 : i64, scratch_operands = 0 : i64, tpu.core_type = #tpu.core_type<tc>, window_params = [{transform_indices = @transform_0, window_bounds = array<i64: 1, 16, 48>}, {pipeline_mode = #tpu.pipeline_mode<synchronous>, transform_indices = @transform_1, window_bounds = array<i64: 48, 32>}, {pipeline_mode = #tpu.pipeline_mode<synchronous>, transform_indices = @transform_2, window_bounds = array<i64: 1, 32>}, {pipeline_mode = #tpu.pipeline_mode<synchronous>, transform_indices = @transform_3, window_bounds = array<i64: 9, 32>}, {pipeline_mode = #tpu.pipeline_mode<synchronous>, transform_indices = @transform_4, window_bounds = array<i64: 32, 64>}, {pipeline_mode = #tpu.pipeline_mode<synchronous>, transform_indices = @transform_5, window_bounds = array<i64: 1, 64>}, {pipeline_mode = #tpu.pipeline_mode<synchronous>, transform_indices = @transform_6, window_bounds = array<i64: 32, 8>}, {pipeline_mode = #tpu.pipeline_mode<synchronous>, transform_indices = @transform_7, window_bounds = array<i64: 1, 8>}, {pipeline_mode = #tpu.pipeline_mode<synchronous>, transform_indices = @transform_8, window_bounds = array<i64: 8, 32>}, {pipeline_mode = #tpu.pipeline_mode<synchronous>, transform_indices = @transform_9, window_bounds = array<i64: 1, 32>}, {pipeline_mode = #tpu.pipeline_mode<synchronous>, transform_indices = @transform_10, window_bounds = array<i64: 9, 32>}, {pipeline_mode = #tpu.pipeline_mode<synchronous>, transform_indices = @transform_11, window_bounds = array<i64: 9, 32>}, {pipeline_mode = #tpu.pipeline_mode<synchronous>, transform_indices = @transform_12, window_bounds = array<i64: 32, 8>}, {pipeline_mode = #tpu.pipeline_mode<synchronous>, transform_indices = @transform_13, window_bounds = array<i64: 1, 8>}, {pipeline_mode = #tpu.pipeline_mode<synchronous>, transform_indices = @transform_14, window_bounds = array<i64: 9, 32>}, {pipeline_mode = #tpu.pipeline_mode<synchronous>, transform_indices = @transform_15, window_bounds = array<i64: 16, 32>}, {pipeline_mode = #tpu.pipeline_mode<synchronous>, transform_indices = @transform_16, window_bounds = array<i64: 64, 32>}, {pipeline_mode = #tpu.pipeline_mode<synchronous>, transform_indices = @transform_17, window_bounds = array<i64: 1, 32>}, {pipeline_mode = #tpu.pipeline_mode<synchronous>, transform_indices = @transform_18, window_bounds = array<i64: 32, 8>}, {pipeline_mode = #tpu.pipeline_mode<synchronous>, transform_indices = @transform_19, window_bounds = array<i64: 1, 8>}, {transform_indices = @transform_20, window_bounds = array<i64: 1, 16, 256>}]} {
    %cst = arith.constant 0.000000e+00 : f32
    %0 = vector.broadcast %cst : f32 to vector<1x16x256xf32>
    %c0 = arith.constant 0 : index
    %c0_0 = arith.constant 0 : index
    %c0_1 = arith.constant 0 : index
    %1 = vector.load %arg21[%c0, %c0_0, %c0_1] : memref<1x16x256xf32, #tpu.memory_space<vmem>>, vector<1x16x256xf32>
    tpu.vector_store %arg21[%c0, %c0_0, %c0_1], %0 {strides = array<i32>} : memref<1x16x256xf32, #tpu.memory_space<vmem>>, vector<1x16x256xf32>,
    %c0_2 = arith.constant 0 : index
    %c0_3 = arith.constant 0 : index
    %c0_4 = arith.constant 0 : index
    %2 = vector.load %arg1[%c0_2, %c0_3, %c0_4] : memref<1x16x48xf32, #tpu.memory_space<vmem>>, vector<1x16x48xf32>
    %3 = vector.shape_cast %2 : vector<1x16x48xf32> to vector<16x48xf32>
    %c0_5 = arith.constant 0 : index
    %c0_6 = arith.constant 0 : index
    %4 = vector.load %arg2[%c0_5, %c0_6] : memref<48x32xbf16, #tpu.memory_space<vmem>>, vector<48x32xbf16>
    %5 = arith.truncf %3 : vector<16x48xf32> to vector<16x48xbf16>
    %cst_7 = arith.constant dense<0.000000e+00> : vector<16x32xf32>
    %6 = tpu.matmul %5, %4, %cst_7 {dimension_numbers = #tpu.dot_dimension_numbers<[1], [0], [0], [1], [0, 0, 1, 1], [], []>} : vector<16x48xbf16>, vector<48x32xbf16>, vector<16x32xf32> -> vector<16x32xf32>
    %c0_8 = arith.constant 0 : index
    %c0_9 = arith.constant 0 : index
    %7 = vector.load %arg3[%c0_8, %c0_9] : memref<1x32xf32, #tpu.memory_space<vmem>>, vector<1x32xf32>
    %8 = vector.broadcast %7 : vector<1x32xf32> to vector<16x32xf32>
    %9 = arith.addf %6, %8 : vector<16x32xf32>
    %cst_10 = arith.constant 0.000000e+00 : f32
    %10 = vector.broadcast %cst_10 : f32 to vector<16x32xf32>
    %11 = arith.maximumf %9, %10 : vector<16x32xf32>
    %c0_11 = arith.constant 0 : index
    %c0_12 = arith.constant 0 : index
    %12 = vector.load %arg5[%c0_11, %c0_12] : memref<32x64xbf16, #tpu.memory_space<vmem>>, vector<32x64xbf16>
    %13 = arith.truncf %11 : vector<16x32xf32> to vector<16x32xbf16>
    %cst_13 = arith.constant dense<0.000000e+00> : vector<16x64xf32>
    %14 = tpu.matmul %13, %12, %cst_13 {dimension_numbers = #tpu.dot_dimension_numbers<[1], [0], [0], [1], [0, 0, 1, 1], [], []>} : vector<16x32xbf16>, vector<32x64xbf16>, vector<16x64xf32> -> vector<16x64xf32>
    %c0_14 = arith.constant 0 : index
    %c0_15 = arith.constant 0 : index
    %15 = vector.load %arg6[%c0_14, %c0_15] : memref<1x64xf32, #tpu.memory_space<vmem>>, vector<1x64xf32>
    %16 = vector.broadcast %15 : vector<1x64xf32> to vector<16x64xf32>
    %17 = arith.addf %14, %16 : vector<16x64xf32>
    %18 = vector.extract_strided_slice %17 {offsets = [0, 0], sizes = [16, 32], strides = [1, 1]} : vector<16x64xf32> to vector<16x32xf32>
    %19 = vector.extract_strided_slice %17 {offsets = [0, 32], sizes = [16, 32], strides = [1, 1]} : vector<16x64xf32> to vector<16x32xf32>
    %c0_16 = arith.constant 0 : index
    %c0_17 = arith.constant 0 : index
    %20 = vector.load %arg4[%c0_16, %c0_17] : memref<9x32xbf16, #tpu.memory_space<vmem>>, vector<9x32xbf16>
    %21 = arith.truncf %18 : vector<16x32xf32> to vector<16x32xbf16>
    %cst_18 = arith.constant dense<0.000000e+00> : vector<9x16xf32>
    %22 = tpu.matmul %20, %21, %cst_18 {dimension_numbers = #tpu.dot_dimension_numbers<[1], [1], [0], [0], [0, 0, 1, 0], [], []>} : vector<9x32xbf16>, vector<16x32xbf16>, vector<9x16xf32> -> vector<9x16xf32>
    %cst_19 = arith.constant 0.176776692 : f32
    %23 = vector.broadcast %cst_19 : f32 to vector<9x16xf32>
    %24 = arith.mulf %22, %23 : vector<9x16xf32>
    %cst_20 = arith.constant dense<0xFF800000> : vector<9xf32>
    %25 = vector.multi_reduction <maximumf>, %24, %cst_20 [1] : vector<9x16xf32> to vector<9xf32>
    %26 = vector.shape_cast %25 : vector<9xf32> to vector<9x1xf32>
    %27 = vector.broadcast %26 : vector<9x1xf32> to vector<9x16xf32>
    %28 = arith.subf %24, %27 : vector<9x16xf32>
    %29 = math.exp %28 : vector<9x16xf32>
    %cst_21 = arith.constant dense<0.000000e+00> : vector<9xf32>
    %30 = vector.multi_reduction <add>, %29, %cst_21 [1] : vector<9x16xf32> to vector<9xf32>
    %31 = vector.shape_cast %30 : vector<9xf32> to vector<9x1xf32>
    %32 = tpu.reciprocal %31 {approx = true} : vector<9x1xf32> -> vector<9x1xf32>
    %33 = vector.broadcast %32 : vector<9x1xf32> to vector<9x16xf32>
    %34 = arith.mulf %29, %33 : vector<9x16xf32>
    %35 = arith.truncf %34 : vector<9x16xf32> to vector<9x16xbf16>
    %36 = arith.truncf %19 : vector<16x32xf32> to vector<16x32xbf16>
    %cst_22 = arith.constant dense<0.000000e+00> : vector<9x32xf32>
    %37 = tpu.matmul %35, %36, %cst_22 {dimension_numbers = #tpu.dot_dimension_numbers<[1], [0], [0], [1], [0, 0, 1, 1], [], []>} : vector<9x16xbf16>, vector<16x32xbf16>, vector<9x32xf32> -> vector<9x32xf32>
    %c0_23 = arith.constant 0 : index
    %c0_24 = arith.constant 0 : index
    %38 = vector.load %arg7[%c0_23, %c0_24] : memref<32x8xbf16, #tpu.memory_space<vmem>>, vector<32x8xbf16>
    %39 = arith.truncf %37 : vector<9x32xf32> to vector<9x32xbf16>
    %cst_25 = arith.constant dense<0.000000e+00> : vector<9x8xf32>
    %40 = tpu.matmul %39, %38, %cst_25 {dimension_numbers = #tpu.dot_dimension_numbers<[1], [0], [0], [1], [0, 0, 1, 1], [], []>} : vector<9x32xbf16>, vector<32x8xbf16>, vector<9x8xf32> -> vector<9x8xf32>
    %c0_26 = arith.constant 0 : index
    %c0_27 = arith.constant 0 : index
    %41 = vector.load %arg8[%c0_26, %c0_27] : memref<1x8xf32, #tpu.memory_space<vmem>>, vector<1x8xf32>
    %42 = vector.broadcast %41 : vector<1x8xf32> to vector<9x8xf32>
    %43 = arith.addf %40, %42 : vector<9x8xf32>
    %c0_28 = arith.constant 0 : index
    %c0_29 = arith.constant 0 : index
    %c0_30 = arith.constant 0 : index
    %44 = vector.load %arg21[%c0_28, %c0_29, %c0_30] : memref<1x16x256xf32, #tpu.memory_space<vmem>>, vector<1x16x32xf32>
    %45 = vector.shape_cast %44 : vector<1x16x32xf32> to vector<16x32xf32>
    %46 = vector.shape_cast %11 : vector<16x32xf32> to vector<1x16x32xf32>
    tpu.vector_store %arg21[%c0_28, %c0_29, %c0_30], %46 {strides = array<i32>} : memref<1x16x256xf32, #tpu.memory_space<vmem>>, vector<1x16x32xf32>,
    %47 = tpu.concatenate %37, %34, %43 in 1 : vector<9x32xf32>, vector<9x16xf32>, vector<9x8xf32> -> vector<9x56xf32>
    %c0_31 = arith.constant 0 : index
    %c0_32 = arith.constant 0 : index
    %c32 = arith.constant 32 : index
    %48 = vector.load %arg21[%c0_31, %c0_32, %c32] : memref<1x16x256xf32, #tpu.memory_space<vmem>>, vector<1x9x56xf32>
    %49 = vector.shape_cast %48 : vector<1x9x56xf32> to vector<9x56xf32>
    %50 = vector.shape_cast %47 : vector<9x56xf32> to vector<1x9x56xf32>
    tpu.vector_store %arg21[%c0_31, %c0_32, %c32], %50 {strides = array<i32>} : memref<1x16x256xf32, #tpu.memory_space<vmem>>, vector<1x9x56xf32>,
    %51 = tpu.iota {dimensions = array<i32: 0>} : vector<9x9xi32>
    %52 = tpu.iota {dimensions = array<i32: 1>} : vector<9x9xi32>
    %53 = arith.cmpi eq, %51, %52 : vector<9x9xi32>
    %cst_33 = arith.constant -1.000000e+09 : f32
    %cst_34 = arith.constant 0.000000e+00 : f32
    %54 = vector.broadcast %cst_33 : f32 to vector<9x9xf32>
    %55 = vector.broadcast %cst_34 : f32 to vector<9x9xf32>
    %56 = arith.select %53, %54, %55 : vector<9x9xi1>, vector<9x9xf32>
    %cst_35 = arith.constant dense<0xFF800000> : vector<9xf32>
    %57 = vector.multi_reduction <maximumf>, %43, %cst_35 [1] : vector<9x8xf32> to vector<9xf32>
    %58 = vector.shape_cast %57 : vector<9xf32> to vector<9x1xf32>
    %59 = vector.extract_strided_slice %43 {offsets = [0, 0], sizes = [9, 1], strides = [1, 1]} : vector<9x8xf32> to vector<9x1xf32>
    %60 = arith.cmpf oge, %59, %58 : vector<9x1xf32>
    %61 = tpu.iota {dimensions = array<i32: 0>} : vector<9x1xi32>
    %c1_i32 = arith.constant 1 : i32
    %62 = vector.broadcast %c1_i32 : i32 to vector<9x1xi32>
    %63 = arith.addi %61, %62 : vector<9x1xi32>
    %c9_i32 = arith.constant 9 : i32
    %64 = vector.broadcast %c9_i32 : i32 to vector<9x1xi32>
    %65 = arith.select %60, %63, %64 : vector<9x1xi1>, vector<9x1xi32>
    %cst_36 = arith.constant dense<2147483647> : vector<1xi32>
    %66 = vector.multi_reduction <minsi>, %65, %cst_36 [0] : vector<9x1xi32> to vector<1xi32>
    %67 = vector.shape_cast %66 : vector<1xi32> to vector<1x1xi32>
    %c2_i32 = arith.constant 2 : i32
    %c9_i32_37 = arith.constant 9 : i32
    %68 = vector.broadcast %c2_i32 : i32 to vector<1x1xi32>
    %69 = arith.maxsi %68, %67 : vector<1x1xi32>
    %70 = vector.broadcast %c9_i32_37 : i32 to vector<1x1xi32>
    %71 = arith.minsi %70, %69 : vector<1x1xi32>
    %cst_38 = arith.constant dense<0xFF800000> : vector<9xf32>
    %72 = vector.multi_reduction <maximumf>, %43, %cst_38 [1] : vector<9x8xf32> to vector<9xf32>
    %73 = vector.shape_cast %72 : vector<9xf32> to vector<9x1xf32>
    %74 = vector.broadcast %73 : vector<9x1xf32> to vector<9x8xf32>
    %75 = arith.subf %43, %74 : vector<9x8xf32>
    %76 = math.exp %75 : vector<9x8xf32>
    %cst_39 = arith.constant dense<0.000000e+00> : vector<9xf32>
    %77 = vector.multi_reduction <add>, %76, %cst_39 [1] : vector<9x8xf32> to vector<9xf32>
    %78 = vector.shape_cast %77 : vector<9xf32> to vector<9x1xf32>
    %79 = tpu.reciprocal %78 {approx = true} : vector<9x1xf32> -> vector<9x1xf32>
    %80 = vector.broadcast %79 : vector<9x1xf32> to vector<9x8xf32>
    %81 = arith.mulf %76, %80 : vector<9x8xf32>
    %c0_40 = arith.constant 0 : index
    %c0_41 = arith.constant 0 : index
    %82 = vector.load %arg9[%c0_40, %c0_41] : memref<8x32xbf16, #tpu.memory_space<vmem>>, vector<8x32xbf16>
    %83 = arith.truncf %81 : vector<9x8xf32> to vector<9x8xbf16>
    %cst_42 = arith.constant dense<0.000000e+00> : vector<9x32xf32>
    %84 = tpu.matmul %83, %82, %cst_42 {dimension_numbers = #tpu.dot_dimension_numbers<[1], [0], [0], [1], [0, 0, 1, 1], [], []>} : vector<9x8xbf16>, vector<8x32xbf16>, vector<9x32xf32> -> vector<9x32xf32>
    %c0_43 = arith.constant 0 : index
    %c0_44 = arith.constant 0 : index
    %85 = vector.load %arg10[%c0_43, %c0_44] : memref<1x32xf32, #tpu.memory_space<vmem>>, vector<1x32xf32>
    %86 = vector.broadcast %85 : vector<1x32xf32> to vector<9x32xf32>
    %87 = arith.addf %84, %86 : vector<9x32xf32>
    %c0_45 = arith.constant 0 : index
    %c0_46 = arith.constant 0 : index
    %88 = vector.load %arg11[%c0_45, %c0_46] : memref<9x32xf32, #tpu.memory_space<vmem>>, vector<9x32xf32>
    %89 = arith.addf %87, %88 : vector<9x32xf32>
    %c0_47 = arith.constant 0 : index
    %c0_48 = arith.constant 0 : index
    %90 = vector.load %arg12[%c0_47, %c0_48] : memref<9x32xbf16, #tpu.memory_space<vmem>>, vector<9x32xbf16>
    %91 = arith.truncf %89 : vector<9x32xf32> to vector<9x32xbf16>
    %cst_49 = arith.constant dense<0.000000e+00> : vector<9x9xf32>
    %92 = tpu.matmul %90, %91, %cst_49 {dimension_numbers = #tpu.dot_dimension_numbers<[1], [1], [0], [0], [0, 0, 1, 0], [], []>} : vector<9x32xbf16>, vector<9x32xbf16>, vector<9x9xf32> -> vector<9x9xf32>
    %cst_50 = arith.constant 0.176776692 : f32
    %93 = vector.broadcast %cst_50 : f32 to vector<9x9xf32>
    %94 = arith.mulf %92, %93 : vector<9x9xf32>
    %95 = vector.broadcast %71 : vector<1x1xi32> to vector<9x9xi32>
    %96 = arith.cmpi slt, %52, %95 : vector<9x9xi32>
    %cst_51 = arith.constant 0.000000e+00 : f32
    %cst_52 = arith.constant -1.000000e+09 : f32
    %97 = vector.broadcast %cst_51 : f32 to vector<9x9xf32>
    %98 = vector.broadcast %cst_52 : f32 to vector<9x9xf32>
    %99 = arith.select %96, %97, %98 : vector<9x9xi1>, vector<9x9xf32>
    %100 = arith.addf %94, %99 : vector<9x9xf32>
    %101 = arith.addf %100, %56 : vector<9x9xf32>
    %cst_53 = arith.constant dense<0xFF800000> : vector<9xf32>
    %102 = vector.multi_reduction <maximumf>, %101, %cst_53 [1] : vector<9x9xf32> to vector<9xf32>
    %103 = vector.shape_cast %102 : vector<9xf32> to vector<9x1xf32>
    %104 = vector.broadcast %103 : vector<9x1xf32> to vector<9x9xf32>
    %105 = arith.subf %101, %104 : vector<9x9xf32>
    %106 = math.exp %105 : vector<9x9xf32>
    %cst_54 = arith.constant dense<0.000000e+00> : vector<9xf32>
    %107 = vector.multi_reduction <add>, %106, %cst_54 [1] : vector<9x9xf32> to vector<9xf32>
    %108 = vector.shape_cast %107 : vector<9xf32> to vector<9x1xf32>
    %109 = tpu.reciprocal %108 {approx = true} : vector<9x1xf32> -> vector<9x1xf32>
    %110 = vector.broadcast %109 : vector<9x1xf32> to vector<9x9xf32>
    %111 = arith.mulf %106, %110 : vector<9x9xf32>
    %112 = arith.truncf %111 : vector<9x9xf32> to vector<9x9xbf16>
    %113 = arith.truncf %89 : vector<9x32xf32> to vector<9x32xbf16>
    %cst_55 = arith.constant dense<0.000000e+00> : vector<9x32xf32>
    %114 = tpu.matmul %112, %113, %cst_55 {dimension_numbers = #tpu.dot_dimension_numbers<[1], [0], [0], [1], [0, 0, 1, 1], [], []>} : vector<9x9xbf16>, vector<9x32xbf16>, vector<9x32xf32> -> vector<9x32xf32>
    %c0_56 = arith.constant 0 : index
    %c0_57 = arith.constant 0 : index
    %115 = vector.load %arg13[%c0_56, %c0_57] : memref<32x8xbf16, #tpu.memory_space<vmem>>, vector<32x8xbf16>
    %116 = arith.truncf %114 : vector<9x32xf32> to vector<9x32xbf16>
    %cst_58 = arith.constant dense<0.000000e+00> : vector<9x8xf32>
    %117 = tpu.matmul %116, %115, %cst_58 {dimension_numbers = #tpu.dot_dimension_numbers<[1], [0], [0], [1], [0, 0, 1, 1], [], []>} : vector<9x32xbf16>, vector<32x8xbf16>, vector<9x8xf32> -> vector<9x8xf32>
    %c0_59 = arith.constant 0 : index
    %c0_60 = arith.constant 0 : index
    %118 = vector.load %arg14[%c0_59, %c0_60] : memref<1x8xf32, #tpu.memory_space<vmem>>, vector<1x8xf32>
    %119 = vector.broadcast %118 : vector<1x8xf32> to vector<9x8xf32>
    %120 = arith.addf %117, %119 : vector<9x8xf32>
    %121 = arith.truncf %34 : vector<9x16xf32> to vector<9x16xbf16>
    %122 = arith.truncf %11 : vector<16x32xf32> to vector<16x32xbf16>
    %cst_61 = arith.constant dense<0.000000e+00> : vector<9x32xf32>
    %123 = tpu.matmul %121, %122, %cst_61 {dimension_numbers = #tpu.dot_dimension_numbers<[1], [0], [0], [1], [0, 0, 1, 1], [], []>} : vector<9x16xbf16>, vector<16x32xbf16>, vector<9x32xf32> -> vector<9x32xf32>
    %c0_62 = arith.constant 0 : index
    %c0_63 = arith.constant 0 : index
    %124 = vector.load %arg15[%c0_62, %c0_63] : memref<9x32xf32, #tpu.memory_space<vmem>>, vector<9x32xf32>
    %125 = arith.addf %114, %124 : vector<9x32xf32>
    %c0_64 = arith.constant 0 : index
    %c0_65 = arith.constant 0 : index
    %126 = vector.load %arg16[%c0_64, %c0_65] : memref<16x32xf32, #tpu.memory_space<vmem>>, vector<16x32xf32>
    %127 = arith.addf %11, %126 : vector<16x32xf32>
    %128 = arith.truncf %125 : vector<9x32xf32> to vector<9x32xbf16>
    %129 = arith.truncf %127 : vector<16x32xf32> to vector<16x32xbf16>
    %cst_66 = arith.constant dense<0.000000e+00> : vector<9x16xf32>
    %130 = tpu.matmul %128, %129, %cst_66 {dimension_numbers = #tpu.dot_dimension_numbers<[1], [1], [0], [0], [0, 0, 1, 0], [], []>} : vector<9x32xbf16>, vector<16x32xbf16>, vector<9x16xf32> -> vector<9x16xf32>
    %cst_67 = arith.constant 0.176776692 : f32
    %131 = vector.broadcast %cst_67 : f32 to vector<9x16xf32>
    %132 = arith.mulf %130, %131 : vector<9x16xf32>
    %cst_68 = arith.constant dense<0xFF800000> : vector<9xf32>
    %133 = vector.multi_reduction <maximumf>, %132, %cst_68 [1] : vector<9x16xf32> to vector<9xf32>
    %134 = vector.shape_cast %133 : vector<9xf32> to vector<9x1xf32>
    %135 = vector.broadcast %134 : vector<9x1xf32> to vector<9x16xf32>
    %136 = arith.subf %132, %135 : vector<9x16xf32>
    %137 = math.exp %136 : vector<9x16xf32>
    %cst_69 = arith.constant dense<0.000000e+00> : vector<9xf32>
    %138 = vector.multi_reduction <add>, %137, %cst_69 [1] : vector<9x16xf32> to vector<9xf32>
    %139 = vector.shape_cast %138 : vector<9xf32> to vector<9x1xf32>
    %140 = tpu.reciprocal %139 {approx = true} : vector<9x1xf32> -> vector<9x1xf32>
    %141 = vector.broadcast %140 : vector<9x1xf32> to vector<9x16xf32>
    %142 = arith.mulf %137, %141 : vector<9x16xf32>
    %143 = arith.truncf %142 : vector<9x16xf32> to vector<9x16xbf16>
    %144 = arith.truncf %11 : vector<16x32xf32> to vector<16x32xbf16>
    %cst_70 = arith.constant dense<0.000000e+00> : vector<9x32xf32>
    %145 = tpu.matmul %143, %144, %cst_70 {dimension_numbers = #tpu.dot_dimension_numbers<[1], [0], [0], [1], [0, 0, 1, 1], [], []>} : vector<9x16xbf16>, vector<16x32xbf16>, vector<9x32xf32> -> vector<9x32xf32>
    %146 = arith.addf %123, %145 : vector<9x32xf32>
    %147 = tpu.concatenate %114, %146 in 1 : vector<9x32xf32>, vector<9x32xf32> -> vector<9x64xf32>
    %c0_71 = arith.constant 0 : index
    %c0_72 = arith.constant 0 : index
    %148 = vector.load %arg17[%c0_71, %c0_72] : memref<64x32xbf16, #tpu.memory_space<vmem>>, vector<64x32xbf16>
    %149 = arith.truncf %147 : vector<9x64xf32> to vector<9x64xbf16>
    %cst_73 = arith.constant dense<0.000000e+00> : vector<9x32xf32>
    %150 = tpu.matmul %149, %148, %cst_73 {dimension_numbers = #tpu.dot_dimension_numbers<[1], [0], [0], [1], [0, 0, 1, 1], [], []>} : vector<9x64xbf16>, vector<64x32xbf16>, vector<9x32xf32> -> vector<9x32xf32>
    %c0_74 = arith.constant 0 : index
    %c0_75 = arith.constant 0 : index
    %151 = vector.load %arg18[%c0_74, %c0_75] : memref<1x32xf32, #tpu.memory_space<vmem>>, vector<1x32xf32>
    %152 = vector.broadcast %151 : vector<1x32xf32> to vector<9x32xf32>
    %153 = arith.addf %150, %152 : vector<9x32xf32>
    %154 = arith.negf %153 : vector<9x32xf32>
    %155 = math.exp %154 : vector<9x32xf32>
    %cst_76 = arith.constant 1.000000e+00 : f32
    %156 = vector.broadcast %cst_76 : f32 to vector<9x32xf32>
    %157 = arith.addf %156, %155 : vector<9x32xf32>
    %158 = arith.divf %156, %157 : vector<9x32xf32>
    %159 = arith.mulf %158, %114 : vector<9x32xf32>
    %cst_77 = arith.constant 1.000000e+00 : f32
    %160 = vector.broadcast %cst_77 : f32 to vector<9x32xf32>
    %161 = arith.subf %160, %158 : vector<9x32xf32>
    %162 = arith.mulf %161, %146 : vector<9x32xf32>
    %163 = arith.addf %159, %162 : vector<9x32xf32>
    %c0_78 = arith.constant 0 : index
    %c0_79 = arith.constant 0 : index
    %164 = vector.load %arg19[%c0_78, %c0_79] : memref<32x8xbf16, #tpu.memory_space<vmem>>, vector<32x8xbf16>
    %165 = arith.truncf %163 : vector<9x32xf32> to vector<9x32xbf16>
    %cst_80 = arith.constant dense<0.000000e+00> : vector<9x8xf32>
    %166 = tpu.matmul %165, %164, %cst_80 {dimension_numbers = #tpu.dot_dimension_numbers<[1], [0], [0], [1], [0, 0, 1, 1], [], []>} : vector<9x32xbf16>, vector<32x8xbf16>, vector<9x8xf32> -> vector<9x8xf32>
    %c0_81 = arith.constant 0 : index
    %c0_82 = arith.constant 0 : index
    %167 = vector.load %arg20[%c0_81, %c0_82] : memref<1x8xf32, #tpu.memory_space<vmem>>, vector<1x8xf32>
    %168 = vector.broadcast %167 : vector<1x8xf32> to vector<9x8xf32>
    %169 = arith.addf %166, %168 : vector<9x8xf32>
    %170 = tpu.concatenate %114, %120, %169 in 1 : vector<9x32xf32>, vector<9x8xf32>, vector<9x8xf32> -> vector<9x48xf32>
    %c0_83 = arith.constant 0 : index
    %c0_84 = arith.constant 0 : index
    %c128 = arith.constant 128 : index
    %171 = vector.load %arg21[%c0_83, %c0_84, %c128] : memref<1x16x256xf32, #tpu.memory_space<vmem>>, vector<1x9x48xf32>
    %172 = vector.shape_cast %171 : vector<1x9x48xf32> to vector<9x48xf32>
    %173 = vector.shape_cast %170 : vector<9x48xf32> to vector<1x9x48xf32>
    tpu.vector_store %arg21[%c0_83, %c0_84, %c128], %173 {strides = array<i32>} : memref<1x16x256xf32, #tpu.memory_space<vmem>>, vector<1x9x48xf32>,
    return
  }
  func.func @transform_0(%arg0: i32) -> (i32, i32, i32) {
    %c0_i32 = arith.constant 0 : i32
    %c0_i32_0 = arith.constant 0 : i32
    %c0_i32_1 = arith.constant 0 : i32
    return %arg0, %c0_i32, %c0_i32_0 : i32, i32, i32
  }
  func.func @transform_1(%arg0: i32) -> (i32, i32) {
    %c0_i32 = arith.constant 0 : i32
    %c0_i32_0 = arith.constant 0 : i32
    %c0_i32_1 = arith.constant 0 : i32
    return %c0_i32, %c0_i32_0 : i32, i32
  }
  func.func @transform_2(%arg0: i32) -> (i32, i32) {
    %c0_i32 = arith.constant 0 : i32
    %c0_i32_0 = arith.constant 0 : i32
    %c0_i32_1 = arith.constant 0 : i32
    return %c0_i32, %c0_i32_0 : i32, i32
  }
  func.func @transform_3(%arg0: i32) -> (i32, i32) {
    %c0_i32 = arith.constant 0 : i32
    %c0_i32_0 = arith.constant 0 : i32
    %c0_i32_1 = arith.constant 0 : i32
    return %c0_i32, %c0_i32_0 : i32, i32
  }
  func.func @transform_4(%arg0: i32) -> (i32, i32) {
    %c0_i32 = arith.constant 0 : i32
    %c0_i32_0 = arith.constant 0 : i32
    %c0_i32_1 = arith.constant 0 : i32
    return %c0_i32, %c0_i32_0 : i32, i32
  }
  func.func @transform_5(%arg0: i32) -> (i32, i32) {
    %c0_i32 = arith.constant 0 : i32
    %c0_i32_0 = arith.constant 0 : i32
    %c0_i32_1 = arith.constant 0 : i32
    return %c0_i32, %c0_i32_0 : i32, i32
  }
  func.func @transform_6(%arg0: i32) -> (i32, i32) {
    %c0_i32 = arith.constant 0 : i32
    %c0_i32_0 = arith.constant 0 : i32
    %c0_i32_1 = arith.constant 0 : i32
    return %c0_i32, %c0_i32_0 : i32, i32
  }
  func.func @transform_7(%arg0: i32) -> (i32, i32) {
    %c0_i32 = arith.constant 0 : i32
    %c0_i32_0 = arith.constant 0 : i32
    %c0_i32_1 = arith.constant 0 : i32
    return %c0_i32, %c0_i32_0 : i32, i32
  }
  func.func @transform_8(%arg0: i32) -> (i32, i32) {
    %c0_i32 = arith.constant 0 : i32
    %c0_i32_0 = arith.constant 0 : i32
    %c0_i32_1 = arith.constant 0 : i32
    return %c0_i32, %c0_i32_0 : i32, i32
  }
  func.func @transform_9(%arg0: i32) -> (i32, i32) {
    %c0_i32 = arith.constant 0 : i32
    %c0_i32_0 = arith.constant 0 : i32
    %c0_i32_1 = arith.constant 0 : i32
    return %c0_i32, %c0_i32_0 : i32, i32
  }
  func.func @transform_10(%arg0: i32) -> (i32, i32) {
    %c0_i32 = arith.constant 0 : i32
    %c0_i32_0 = arith.constant 0 : i32
    %c0_i32_1 = arith.constant 0 : i32
    return %c0_i32, %c0_i32_0 : i32, i32
  }
  func.func @transform_11(%arg0: i32) -> (i32, i32) {
    %c0_i32 = arith.constant 0 : i32
    %c0_i32_0 = arith.constant 0 : i32
    %c0_i32_1 = arith.constant 0 : i32
    return %c0_i32, %c0_i32_0 : i32, i32
  }
  func.func @transform_12(%arg0: i32) -> (i32, i32) {
    %c0_i32 = arith.constant 0 : i32
    %c0_i32_0 = arith.constant 0 : i32
    %c0_i32_1 = arith.constant 0 : i32
    return %c0_i32, %c0_i32_0 : i32, i32
  }
  func.func @transform_13(%arg0: i32) -> (i32, i32) {
    %c0_i32 = arith.constant 0 : i32
    %c0_i32_0 = arith.constant 0 : i32
    %c0_i32_1 = arith.constant 0 : i32
    return %c0_i32, %c0_i32_0 : i32, i32
  }
  func.func @transform_14(%arg0: i32) -> (i32, i32) {
    %c0_i32 = arith.constant 0 : i32
    %c0_i32_0 = arith.constant 0 : i32
    %c0_i32_1 = arith.constant 0 : i32
    return %c0_i32, %c0_i32_0 : i32, i32
  }
  func.func @transform_15(%arg0: i32) -> (i32, i32) {
    %c0_i32 = arith.constant 0 : i32
    %c0_i32_0 = arith.constant 0 : i32
    %c0_i32_1 = arith.constant 0 : i32
    return %c0_i32, %c0_i32_0 : i32, i32
  }
  func.func @transform_16(%arg0: i32) -> (i32, i32) {
    %c0_i32 = arith.constant 0 : i32
    %c0_i32_0 = arith.constant 0 : i32
    %c0_i32_1 = arith.constant 0 : i32
    return %c0_i32, %c0_i32_0 : i32, i32
  }
  func.func @transform_17(%arg0: i32) -> (i32, i32) {
    %c0_i32 = arith.constant 0 : i32
    %c0_i32_0 = arith.constant 0 : i32
    %c0_i32_1 = arith.constant 0 : i32
    return %c0_i32, %c0_i32_0 : i32, i32
  }
  func.func @transform_18(%arg0: i32) -> (i32, i32) {
    %c0_i32 = arith.constant 0 : i32
    %c0_i32_0 = arith.constant 0 : i32
    %c0_i32_1 = arith.constant 0 : i32
    return %c0_i32, %c0_i32_0 : i32, i32
  }
  func.func @transform_19(%arg0: i32) -> (i32, i32) {
    %c0_i32 = arith.constant 0 : i32
    %c0_i32_0 = arith.constant 0 : i32
    %c0_i32_1 = arith.constant 0 : i32
    return %c0_i32, %c0_i32_0 : i32, i32
  }
  func.func @transform_20(%arg0: i32) -> (i32, i32, i32) {
    %c0_i32 = arith.constant 0 : i32
    %c0_i32_0 = arith.constant 0 : i32
    %c0_i32_1 = arith.constant 0 : i32
    return %arg0, %c0_i32, %c0_i32_0 : i32, i32, i32
  }
}

</mosaic_0001>

<llo_original>
// kernel: tpu_custom_call.1
$region0: #{tpu_custom_call.1}
  #allocation0 [shape = 'u32[]', space=smem, size = 0x4, offset = 0x4, fixed_abs, tag = 'smem constant byte address 0x4 - core index']
  #allocation1 [shape = 'u32[72,128]{1,0:T(1,128)}', space=vmem, size = 0x9000, scoped, tag = 'internal scratch']
  %s0 = inlined_call_operand.vmem [shape: f32[2,16,48], index: 0, kind: input, shape index: {}]
  %s1 = inlined_call_operand.vmem [shape: bf16[48,32], index: 1, kind: input, shape index: {}]
  %s2 = inlined_call_operand.vmem [shape: f32[1,32], index: 2, kind: input, shape index: {}]
  %s3 = inlined_call_operand.vmem [shape: bf16[9,32], index: 3, kind: input, shape index: {}]
  %s4 = inlined_call_operand.vmem [shape: bf16[32,64], index: 4, kind: input, shape index: {}]
  %s5 = inlined_call_operand.hbm [shape: f32[1,64], index: 5, kind: input, shape index: {}]
  %s6 = inlined_call_operand.vmem [shape: bf16[32,8], index: 6, kind: input, shape index: {}]
  %s7 = inlined_call_operand.hbm [shape: f32[1,8], index: 7, kind: input, shape index: {}]
  %s8 = inlined_call_operand.vmem [shape: bf16[8,32], index: 8, kind: input, shape index: {}]
  %s9 = inlined_call_operand.vmem [shape: f32[1,32], index: 9, kind: input, shape index: {}]
  %s10 = inlined_call_operand.vmem [shape: f32[9,32], index: 10, kind: input, shape index: {}]
  %s11 = inlined_call_operand.hbm [shape: bf16[9,32], index: 11, kind: input, shape index: {}]
  %s12 = inlined_call_operand.vmem [shape: bf16[32,8], index: 12, kind: input, shape index: {}]
  %s13 = inlined_call_operand.vmem [shape: f32[1,8], index: 13, kind: input, shape index: {}]
  %s14 = inlined_call_operand.vmem [shape: f32[9,32], index: 14, kind: input, shape index: {}]
  %s15 = inlined_call_operand.vmem [shape: f32[16,32], index: 15, kind: input, shape index: {}]
  %s16 = inlined_call_operand.vmem [shape: bf16[64,32], index: 16, kind: input, shape index: {}]
  %s17 = inlined_call_operand.vmem [shape: f32[1,32], index: 17, kind: input, shape index: {}]
  %s18 = inlined_call_operand.vmem [shape: bf16[32,8], index: 18, kind: input, shape index: {}]
  %s19 = inlined_call_operand.vmem [shape: f32[1,8], index: 19, kind: input, shape index: {}]
  %s20 = inlined_call_operand.hbm [shape: f32[2,16,256], index: 20, kind: output, shape index: {}]
  %s21 = sld [smem:[#allocation0]]
  $region125: #{tpu_custom_call.1} parent=0
    _
  %s23 = ssub.s32 1, %s21
  %s24 = scalar_select 0, %s23, %s21
  $region1: #{tpu_custom_call.1} parent=0
    #allocation2 [shape = 'u8[512]{0}', space=vmem, size = 0x400, scoped, tag = 'input window, operand 5, single buffered']
    #allocation3 [shape = 's32[2]{0}', space=sflag, size = 0x8, scoped, tag = 'scoped memory for tpu_custom_call.1']
    #allocation4 [shape = 's32[2]{0}', space=sflag, size = 0x8, scoped, tag = 'scoped memory for tpu_custom_call.1']
    #allocation5 [shape = 'u8[512]{0}', space=vmem, size = 0x400, scoped, tag = 'input window, operand 7, single buffered']
    #allocation6 [shape = 's32[1]{0}', space=sflag, size = 0x4, scoped, tag = 'scoped memory for tpu_custom_call.1']
    #allocation7 [shape = 'u8[4096]{0}', space=vmem, size = 0x1000, scoped, tag = 'input window, operand 11, single buffered']
    #allocation8 [shape = 'u8[32768]{0}', space=vmem, size = 0x8000, scoped, tag = 'output window, operand 0']
    %25 = vsyncpa [#allocation3], 0
    %26 = vsyncpa [#allocation6], 0
    %27 = vsyncpa [#allocation4], 0
    %s28 = scalar_lea.sflag [#allocation4], 1
    %29 = vsyncpa %s28, 0
    loop: start=0, step=1, limit=4
    $region2: #{tpu_custom_call.1} parent=1 // loop_pre_header
      _
    $region3: #{tpu_custom_call.1} parent=1 // loop_header
      %s31 = sphi 0, %s35
      %p32 = scmp.ge.s32.totalorder %s31, 4
      %s41 = sphi 0, %s43
      %s44 = sphi 0, %s41
      %s45 = sphi 0, %s44
      %s61 = sphi 0, %s45
      %s65 = sphi 0, %s65
      %s67 = sphi 0, %s65
      %s68 = sphi 0, %s67
      %s82 = sphi 0, %s68
      %s86 = sphi 0, %s86
      %s88 = sphi 0, %s86
      %s89 = sphi 0, %s88
      %s103 = sphi 0, %s89
      %s107 = sphi 0, %s107
      %s109 = sphi 0, %s107
      %s110 = sphi 0, %s109
      %s124 = sphi 0, %s110
      %s128 = sphi 0, %s128
      %s130 = sphi 0, %s128
      %s131 = sphi 0, %s130
      %s145 = sphi 0, %s131
      %s149 = sphi 0, %s149
      %s151 = sphi 0, %s149
      %s152 = sphi 0, %s151
      %s166 = sphi 0, %s152
      %s170 = sphi 0, %s170
      %s172 = sphi 0, %s170
      %s173 = sphi 0, %s172
      %s187 = sphi 0, %s173
      %s191 = sphi 0, %s191
      %s193 = sphi 0, %s191
      %s194 = sphi 0, %s193
      %s208 = sphi 0, %s194
      %s212 = sphi 0, %s212
      %s214 = sphi 0, %s212
      %s215 = sphi 0, %s214
      %s229 = sphi 0, %s215
      %s233 = sphi 0, %s233
      %s235 = sphi 0, %s233
      %s236 = sphi 0, %s235
      %s250 = sphi 0, %s236
      %s254 = sphi 0, %s254
      %s256 = sphi 0, %s254
      %s257 = sphi 0, %s256
      %s271 = sphi 0, %s257
      %s275 = sphi 0, %s275
      %s277 = sphi 0, %s275
      %s278 = sphi 0, %s277
      %s292 = sphi 0, %s278
      %s296 = sphi 0, %s296
      %s298 = sphi 0, %s296
      %s299 = sphi 0, %s298
      %s313 = sphi 0, %s299
      %s317 = sphi 0, %s317
      %s319 = sphi 0, %s317
      %s320 = sphi 0, %s319
      %s334 = sphi 0, %s320
      %s338 = sphi 0, %s338
      %s340 = sphi 0, %s338
      %s341 = sphi 0, %s340
      %s355 = sphi 0, %s341
      %s359 = sphi 0, %s359
      %s361 = sphi 0, %s359
      %s362 = sphi 0, %s361
      %s376 = sphi 0, %s362
      %s380 = sphi 0, %s380
      %s382 = sphi 0, %s380
      %s383 = sphi 0, %s382
      %s397 = sphi 0, %s383
      %s401 = sphi 0, %s401
      %s403 = sphi 0, %s401
      %s404 = sphi 0, %s403
      %s418 = sphi 0, %s404
      %s422 = sphi 0, %s422
      %s424 = sphi 0, %s422
      %s425 = sphi 0, %s424
      %s439 = sphi 0, %s425
      %s443 = sphi 0, %s443
      %s445 = sphi 0, %s443
      %s446 = sphi 0, %s445
      %s460 = sphi 0, %s446
      %s466 = sphi 0, %s468
      %s469 = sphi 0, %s466
      %s470 = sphi 0, %s469
      %s486 = sphi 0, %s470
    $region4: #{tpu_custom_call.1} parent=1 // loop_header_branch
      %34 = sbr.rel (%p32) target = $region8
    $region5: #{tpu_custom_call.1} parent=1 // loop_body
      %s36 = ssub.s32 %s31, 1
      %s37 = ssub.s32 %s31, 2
      %s38 = sadd.s32 %s31, 1
      %s39 = ssub.s32 %s31, %s38
      %p40 = scmp.eq.s32.totalorder %s39, 0
      %s42 = sadd.s32 %s41, 1
      %s43 = scalar_select %p40, %s41, %s42
      %p46 = pneg %p40
      %p47 = scmp.eq.s32.totalorder %s31, 1
      %p48 = por %p46, %p47
      %p49 = scmp.ne.s32.totalorder %s41, %s44
      %p50 = scmp.eq.s32.totalorder %s31, 0
      %p51 = por %p49, %p50
      %p52 = scmp.ne.s32.totalorder %s41, %s44
      %p53 = scmp.eq.s32.totalorder %s36, 1
      %p54 = por %p52, %p53
      %p55 = scmp.ne.s32.totalorder %s44, %s45
      %p56 = scmp.eq.s32.totalorder %s36, 0
      %p57 = por %p55, %p56
      %p58 = scmp.ne.s32.totalorder %s44, %s45
      %p59 = scmp.eq.s32.totalorder %s37, 1
      %p60 = por %p58, %p59
      %p62 = scmp.ne.s32.totalorder %s45, %s61
      %p63 = scmp.eq.s32.totalorder %s37, 0
      %p64 = por %p62, %p63
      %s66 = sadd.s32 %s65, 1
      %p69 = scmp.eq.s32.totalorder %s31, 1
      %p70 = scmp.ne.s32.totalorder %s65, %s67
      %p71 = scmp.eq.s32.totalorder %s31, 0
      %p72 = por %p70, %p71
      %p73 = scmp.ne.s32.totalorder %s65, %s67
      %p74 = scmp.eq.s32.totalorder %s36, 1
      %p75 = por %p73, %p74
      %p76 = scmp.ne.s32.totalorder %s67, %s68
      %p77 = scmp.eq.s32.totalorder %s36, 0
      %p78 = por %p76, %p77
      %p79 = scmp.ne.s32.totalorder %s67, %s68
      %p80 = scmp.eq.s32.totalorder %s37, 1
      %p81 = por %p79, %p80
      %p83 = scmp.ne.s32.totalorder %s68, %s82
      %p84 = scmp.eq.s32.totalorder %s37, 0
      %p85 = por %p83, %p84
      %s87 = sadd.s32 %s86, 1
      %p90 = scmp.eq.s32.totalorder %s31, 1
      %p91 = scmp.ne.s32.totalorder %s86, %s88
      %p92 = scmp.eq.s32.totalorder %s31, 0
      %p93 = por %p91, %p92
      %p94 = scmp.ne.s32.totalorder %s86, %s88
      %p95 = scmp.eq.s32.totalorder %s36, 1
      %p96 = por %p94, %p95
      %p97 = scmp.ne.s32.totalorder %s88, %s89
      %p98 = scmp.eq.s32.totalorder %s36, 0
      %p99 = por %p97, %p98
      %p100 = scmp.ne.s32.totalorder %s88, %s89
      %p101 = scmp.eq.s32.totalorder %s37, 1
      %p102 = por %p100, %p101
      %p104 = scmp.ne.s32.totalorder %s89, %s103
      %p105 = scmp.eq.s32.totalorder %s37, 0
      %p106 = por %p104, %p105
      %s108 = sadd.s32 %s107, 1
      %p111 = scmp.eq.s32.totalorder %s31, 1
      %p112 = scmp.ne.s32.totalorder %s107, %s109
      %p113 = scmp.eq.s32.totalorder %s31, 0
      %p114 = por %p112, %p113
      %p115 = scmp.ne.s32.totalorder %s107, %s109
      %p116 = scmp.eq.s32.totalorder %s36, 1
      %p117 = por %p115, %p116
      %p118 = scmp.ne.s32.totalorder %s109, %s110
      %p119 = scmp.eq.s32.totalorder %s36, 0
      %p120 = por %p118, %p119
      %p121 = scmp.ne.s32.totalorder %s109, %s110
      %p122 = scmp.eq.s32.totalorder %s37, 1
      %p123 = por %p121, %p122
      %p125 = scmp.ne.s32.totalorder %s110, %s124
      %p126 = scmp.eq.s32.totalorder %s37, 0
      %p127 = por %p125, %p126
      %s129 = sadd.s32 %s128, 1
      %p132 = scmp.eq.s32.totalorder %s31, 1
      %p133 = scmp.ne.s32.totalorder %s128, %s130
      %p134 = scmp.eq.s32.totalorder %s31, 0
      %p135 = por %p133, %p134
      %p136 = scmp.ne.s32.totalorder %s128, %s130
      %p137 = scmp.eq.s32.totalorder %s36, 1
      %p138 = por %p136, %p137
      %p139 = scmp.ne.s32.totalorder %s130, %s131
      %p140 = scmp.eq.s32.totalorder %s36, 0
      %p141 = por %p139, %p140
      %p142 = scmp.ne.s32.totalorder %s130, %s131
      %p143 = scmp.eq.s32.totalorder %s37, 1
      %p144 = por %p142, %p143
      %p146 = scmp.ne.s32.totalorder %s131, %s145
      %p147 = scmp.eq.s32.totalorder %s37, 0
      %p148 = por %p146, %p147
      %s150 = sadd.s32 %s149, 1
      %p153 = scmp.eq.s32.totalorder %s31, 1
      %p154 = scmp.ne.s32.totalorder %s149, %s151
      %p155 = scmp.eq.s32.totalorder %s31, 0
      %p156 = por %p154, %p155
      %p157 = scmp.ne.s32.totalorder %s149, %s151
      %p158 = scmp.eq.s32.totalorder %s36, 1
      %p159 = por %p157, %p158
      %p160 = scmp.ne.s32.totalorder %s151, %s152
      %p161 = scmp.eq.s32.totalorder %s36, 0
      %p162 = por %p160, %p161
      %p163 = scmp.ne.s32.totalorder %s151, %s152
      %p164 = scmp.eq.s32.totalorder %s37, 1
      %p165 = por %p163, %p164
      %p167 = scmp.ne.s32.totalorder %s152, %s166
      %p168 = scmp.eq.s32.totalorder %s37, 0
      %p169 = por %p167, %p168
      %s171 = sadd.s32 %s170, 1
      %p174 = scmp.eq.s32.totalorder %s31, 1
      %p175 = scmp.ne.s32.totalorder %s170, %s172
      %p176 = scmp.eq.s32.totalorder %s31, 0
      %p177 = por %p175, %p176
      %p178 = scmp.ne.s32.totalorder %s170, %s172
      %p179 = scmp.eq.s32.totalorder %s36, 1
      %p180 = por %p178, %p179
      %p181 = scmp.ne.s32.totalorder %s172, %s173
      %p182 = scmp.eq.s32.totalorder %s36, 0
      %p183 = por %p181, %p182
      %p184 = scmp.ne.s32.totalorder %s172, %s173
      %p185 = scmp.eq.s32.totalorder %s37, 1
      %p186 = por %p184, %p185
      %p188 = scmp.ne.s32.totalorder %s173, %s187
      %p189 = scmp.eq.s32.totalorder %s37, 0
      %p190 = por %p188, %p189
      %s192 = sadd.s32 %s191, 1
      %p195 = scmp.eq.s32.totalorder %s31, 1
      %p196 = scmp.ne.s32.totalorder %s191, %s193
      %p197 = scmp.eq.s32.totalorder %s31, 0
      %p198 = por %p196, %p197
      %p199 = scmp.ne.s32.totalorder %s191, %s193
      %p200 = scmp.eq.s32.totalorder %s36, 1
      %p201 = por %p199, %p200
      %p202 = scmp.ne.s32.totalorder %s193, %s194
      %p203 = scmp.eq.s32.totalorder %s36, 0
      %p204 = por %p202, %p203
      %p205 = scmp.ne.s32.totalorder %s193, %s194
      %p206 = scmp.eq.s32.totalorder %s37, 1
      %p207 = por %p205, %p206
      %p209 = scmp.ne.s32.totalorder %s194, %s208
      %p210 = scmp.eq.s32.totalorder %s37, 0
      %p211 = por %p209, %p210
      %s213 = sadd.s32 %s212, 1
      %p216 = scmp.eq.s32.totalorder %s31, 1
      %p217 = scmp.ne.s32.totalorder %s212, %s214
      %p218 = scmp.eq.s32.totalorder %s31, 0
      %p219 = por %p217, %p218
      %p220 = scmp.ne.s32.totalorder %s212, %s214
      %p221 = scmp.eq.s32.totalorder %s36, 1
      %p222 = por %p220, %p221
      %p223 = scmp.ne.s32.totalorder %s214, %s215
      %p224 = scmp.eq.s32.totalorder %s36, 0
      %p225 = por %p223, %p224
      %p226 = scmp.ne.s32.totalorder %s214, %s215
      %p227 = scmp.eq.s32.totalorder %s37, 1
      %p228 = por %p226, %p227
      %p230 = scmp.ne.s32.totalorder %s215, %s229
      %p231 = scmp.eq.s32.totalorder %s37, 0
      %p232 = por %p230, %p231
      %s234 = sadd.s32 %s233, 1
      %p237 = scmp.eq.s32.totalorder %s31, 1
      %p238 = scmp.ne.s32.totalorder %s233, %s235
      %p239 = scmp.eq.s32.totalorder %s31, 0
      %p240 = por %p238, %p239
      %p241 = scmp.ne.s32.totalorder %s233, %s235
      %p242 = scmp.eq.s32.totalorder %s36, 1
      %p243 = por %p241, %p242
      %p244 = scmp.ne.s32.totalorder %s235, %s236
      %p245 = scmp.eq.s32.totalorder %s36, 0
      %p246 = por %p244, %p245
      %p247 = scmp.ne.s32.totalorder %s235, %s236
      %p248 = scmp.eq.s32.totalorder %s37, 1
      %p249 = por %p247, %p248
      %p251 = scmp.ne.s32.totalorder %s236, %s250
      %p252 = scmp.eq.s32.totalorder %s37, 0
      %p253 = por %p251, %p252
      %s255 = sadd.s32 %s254, 1
      %p258 = scmp.eq.s32.totalorder %s31, 1
      %p259 = scmp.ne.s32.totalorder %s254, %s256
      %p260 = scmp.eq.s32.totalorder %s31, 0
      %p261 = por %p259, %p260
      %p262 = scmp.ne.s32.totalorder %s254, %s256
      %p263 = scmp.eq.s32.totalorder %s36, 1
      %p264 = por %p262, %p263
      %p265 = scmp.ne.s32.totalorder %s256, %s257
      %p266 = scmp.eq.s32.totalorder %s36, 0
      %p267 = por %p265, %p266
      %p268 = scmp.ne.s32.totalorder %s256, %s257
      %p269 = scmp.eq.s32.totalorder %s37, 1
      %p270 = por %p268, %p269
      %p272 = scmp.ne.s32.totalorder %s257, %s271
      %p273 = scmp.eq.s32.totalorder %s37, 0
      %p274 = por %p272, %p273
      %s276 = sadd.s32 %s275, 1
      %p279 = scmp.eq.s32.totalorder %s31, 1
      %p280 = scmp.ne.s32.totalorder %s275, %s277
      %p281 = scmp.eq.s32.totalorder %s31, 0
      %p282 = por %p280, %p281
      %p283 = scmp.ne.s32.totalorder %s275, %s277
      %p284 = scmp.eq.s32.totalorder %s36, 1
      %p285 = por %p283, %p284
      %p286 = scmp.ne.s32.totalorder %s277, %s278
      %p287 = scmp.eq.s32.totalorder %s36, 0
      %p288 = por %p286, %p287
      %p289 = scmp.ne.s32.totalorder %s277, %s278
      %p290 = scmp.eq.s32.totalorder %s37, 1
      %p291 = por %p289, %p290
      %p293 = scmp.ne.s32.totalorder %s278, %s292
      %p294 = scmp.eq.s32.totalorder %s37, 0
      %p295 = por %p293, %p294
      %s297 = sadd.s32 %s296, 1
      %p300 = scmp.eq.s32.totalorder %s31, 1
      %p301 = scmp.ne.s32.totalorder %s296, %s298
      %p302 = scmp.eq.s32.totalorder %s31, 0
      %p303 = por %p301, %p302
      %p304 = scmp.ne.s32.totalorder %s296, %s298
      %p305 = scmp.eq.s32.totalorder %s36, 1
      %p306 = por %p304, %p305
      %p307 = scmp.ne.s32.totalorder %s298, %s299
      %p308 = scmp.eq.s32.totalorder %s36, 0
      %p309 = por %p307, %p308
      %p310 = scmp.ne.s32.totalorder %s298, %s299
      %p311 = scmp.eq.s32.totalorder %s37, 1
      %p312 = por %p310, %p311
      %p314 = scmp.ne.s32.totalorder %s299, %s313
      %p315 = scmp.eq.s32.totalorder %s37, 0
      %p316 = por %p314, %p315
      %s318 = sadd.s32 %s317, 1
      %p321 = scmp.eq.s32.totalorder %s31, 1
      %p322 = scmp.ne.s32.totalorder %s317, %s319
      %p323 = scmp.eq.s32.totalorder %s31, 0
      %p324 = por %p322, %p323
      %p325 = scmp.ne.s32.totalorder %s317, %s319
      %p326 = scmp.eq.s32.totalorder %s36, 1
      %p327 = por %p325, %p326
      %p328 = scmp.ne.s32.totalorder %s319, %s320
      %p329 = scmp.eq.s32.totalorder %s36, 0
      %p330 = por %p328, %p329
      %p331 = scmp.ne.s32.totalorder %s319, %s320
      %p332 = scmp.eq.s32.totalorder %s37, 1
      %p333 = por %p331, %p332
      %p335 = scmp.ne.s32.totalorder %s320, %s334
      %p336 = scmp.eq.s32.totalorder %s37, 0
      %p337 = por %p335, %p336
      %s339 = sadd.s32 %s338, 1
      %p342 = scmp.eq.s32.totalorder %s31, 1
      %p343 = scmp.ne.s32.totalorder %s338, %s340
      %p344 = scmp.eq.s32.totalorder %s31, 0
      %p345 = por %p343, %p344
      %p346 = scmp.ne.s32.totalorder %s338, %s340
      %p347 = scmp.eq.s32.totalorder %s36, 1
      %p348 = por %p346, %p347
      %p349 = scmp.ne.s32.totalorder %s340, %s341
      %p350 = scmp.eq.s32.totalorder %s36, 0
      %p351 = por %p349, %p350
      %p352 = scmp.ne.s32.totalorder %s340, %s341
      %p353 = scmp.eq.s32.totalorder %s37, 1
      %p354 = por %p352, %p353
      %p356 = scmp.ne.s32.totalorder %s341, %s355
      %p357 = scmp.eq.s32.totalorder %s37, 0
      %p358 = por %p356, %p357
      %s360 = sadd.s32 %s359, 1
      %p363 = scmp.eq.s32.totalorder %s31, 1
      %p364 = scmp.ne.s32.totalorder %s359, %s361
      %p365 = scmp.eq.s32.totalorder %s31, 0
      %p366 = por %p364, %p365
      %p367 = scmp.ne.s32.totalorder %s359, %s361
      %p368 = scmp.eq.s32.totalorder %s36, 1
      %p369 = por %p367, %p368
      %p370 = scmp.ne.s32.totalorder %s361, %s362
      %p371 = scmp.eq.s32.totalorder %s36, 0
      %p372 = por %p370, %p371
      %p373 = scmp.ne.s32.totalorder %s361, %s362
      %p374 = scmp.eq.s32.totalorder %s37, 1
      %p375 = por %p373, %p374
      %p377 = scmp.ne.s32.totalorder %s362, %s376
      %p378 = scmp.eq.s32.totalorder %s37, 0
      %p379 = por %p377, %p378
      %s381 = sadd.s32 %s380, 1
      %p384 = scmp.eq.s32.totalorder %s31, 1
      %p385 = scmp.ne.s32.totalorder %s380, %s382
      %p386 = scmp.eq.s32.totalorder %s31, 0
      %p387 = por %p385, %p386
      %p388 = scmp.ne.s32.totalorder %s380, %s382
      %p389 = scmp.eq.s32.totalorder %s36, 1
      %p390 = por %p388, %p389
      %p391 = scmp.ne.s32.totalorder %s382, %s383
      %p392 = scmp.eq.s32.totalorder %s36, 0
      %p393 = por %p391, %p392
      %p394 = scmp.ne.s32.totalorder %s382, %s383
      %p395 = scmp.eq.s32.totalorder %s37, 1
      %p396 = por %p394, %p395
      %p398 = scmp.ne.s32.totalorder %s383, %s397
      %p399 = scmp.eq.s32.totalorder %s37, 0
      %p400 = por %p398, %p399
      %s402 = sadd.s32 %s401, 1
      %p405 = scmp.eq.s32.totalorder %s31, 1
      %p406 = scmp.ne.s32.totalorder %s401, %s403
      %p407 = scmp.eq.s32.totalorder %s31, 0
      %p408 = por %p406, %p407
      %p409 = scmp.ne.s32.totalorder %s401, %s403
      %p410 = scmp.eq.s32.totalorder %s36, 1
      %p411 = por %p409, %p410
      %p412 = scmp.ne.s32.totalorder %s403, %s404
      %p413 = scmp.eq.s32.totalorder %s36, 0
      %p414 = por %p412, %p413
      %p415 = scmp.ne.s32.totalorder %s403, %s404
      %p416 = scmp.eq.s32.totalorder %s37, 1
      %p417 = por %p415, %p416
      %p419 = scmp.ne.s32.totalorder %s404, %s418
      %p420 = scmp.eq.s32.totalorder %s37, 0
      %p421 = por %p419, %p420
      %s423 = sadd.s32 %s422, 1
      %p426 = scmp.eq.s32.totalorder %s31, 1
      %p427 = scmp.ne.s32.totalorder %s422, %s424
      %p428 = scmp.eq.s32.totalorder %s31, 0
      %p429 = por %p427, %p428
      %p430 = scmp.ne.s32.totalorder %s422, %s424
      %p431 = scmp.eq.s32.totalorder %s36, 1
      %p432 = por %p430, %p431
      %p433 = scmp.ne.s32.totalorder %s424, %s425
      %p434 = scmp.eq.s32.totalorder %s36, 0
      %p435 = por %p433, %p434
      %p436 = scmp.ne.s32.totalorder %s424, %s425
      %p437 = scmp.eq.s32.totalorder %s37, 1
      %p438 = por %p436, %p437
      %p440 = scmp.ne.s32.totalorder %s425, %s439
      %p441 = scmp.eq.s32.totalorder %s37, 0
      %p442 = por %p440, %p441
      %s444 = sadd.s32 %s443, 1
      %p447 = scmp.eq.s32.totalorder %s31, 1
      %p448 = scmp.ne.s32.totalorder %s443, %s445
      %p449 = scmp.eq.s32.totalorder %s31, 0
      %p450 = por %p448, %p449
      %p451 = scmp.ne.s32.totalorder %s443, %s445
      %p452 = scmp.eq.s32.totalorder %s36, 1
      %p453 = por %p451, %p452
      %p454 = scmp.ne.s32.totalorder %s445, %s446
      %p455 = scmp.eq.s32.totalorder %s36, 0
      %p456 = por %p454, %p455
      %p457 = scmp.ne.s32.totalorder %s445, %s446
      %p458 = scmp.eq.s32.totalorder %s37, 1
      %p459 = por %p457, %p458
      %p461 = scmp.ne.s32.totalorder %s446, %s460
      %p462 = scmp.eq.s32.totalorder %s37, 0
      %p463 = por %p461, %p462
      %s464 = ssub.s32 %s31, %s38
      %p465 = scmp.eq.s32.totalorder %s464, 0
      %s467 = sadd.s32 %s466, 1
      %s468 = scalar_select %p465, %s466, %s467
      %p471 = pneg %p465
      %p472 = scmp.eq.s32.totalorder %s31, 1
      %p473 = por %p471, %p472
      %p474 = scmp.ne.s32.totalorder %s466, %s469
      %p475 = scmp.eq.s32.totalorder %s31, 0
      %p476 = por %p474, %p475
      %p477 = scmp.ne.s32.totalorder %s466, %s469
      %p478 = scmp.eq.s32.totalorder %s36, 1
      %p479 = por %p477, %p478
      %p480 = scmp.ne.s32.totalorder %s469, %s470
      %p481 = scmp.eq.s32.totalorder %s36, 0
      %p482 = por %p480, %p481
      %p483 = scmp.ne.s32.totalorder %s469, %s470
      %p484 = scmp.eq.s32.totalorder %s37, 1
      %p485 = por %p483, %p484
      %p487 = scmp.ne.s32.totalorder %s470, %s486
      %p488 = scmp.eq.s32.totalorder %s37, 0
      %p489 = por %p487, %p488
      %p490 = scmp.le.s32.totalorder 1, %s31
      %p491 = scmp.lt.s32.totalorder %s31, 3
      %p492 = pnand %p490, %p491
      %p493 = pneg %p492
      // Predicated region
      $region9: #{tpu_custom_call.1} parent=5 // pred_check
        _
      $region10: #{tpu_custom_call.1} parent=5 // pred_check_branch
        %495 = sbr.rel (%p492) target = $region12
      $region11: #{tpu_custom_call.1} parent=5 // pred_region
        %s496 = ssub.s32 %s31, 1
        // Predicated region
        $region13: #{tpu_custom_call.1} parent=11 // pred_check
          %p497 = pneg %p78
        $region14: #{tpu_custom_call.1} parent=11 // pred_check_branch
          %499 = sbr.rel (%p497) target = $region16
        $region15: #{tpu_custom_call.1} parent=11 // pred_region
          _
        $region16: #{tpu_custom_call.1} parent=11 // pred_fallthru
          _
        // Predicated region
        $region17: #{tpu_custom_call.1} parent=11 // pred_check
          %p500 = pneg %p99
        $region18: #{tpu_custom_call.1} parent=11 // pred_check_branch
          %502 = sbr.rel (%p500) target = $region20
        $region19: #{tpu_custom_call.1} parent=11 // pred_region
          _
        $region20: #{tpu_custom_call.1} parent=11 // pred_fallthru
          _
        // Predicated region
        $region21: #{tpu_custom_call.1} parent=11 // pred_check
          %p503 = pneg %p120
        $region22: #{tpu_custom_call.1} parent=11 // pred_check_branch
          %505 = sbr.rel (%p503) target = $region24
        $region23: #{tpu_custom_call.1} parent=11 // pred_region
          _
        $region24: #{tpu_custom_call.1} parent=11 // pred_fallthru
          _
        // Predicated region
        $region25: #{tpu_custom_call.1} parent=11 // pred_check
          %p506 = pneg %p141
        $region26: #{tpu_custom_call.1} parent=11 // pred_check_branch
          %508 = sbr.rel (%p506) target = $region28
        $region27: #{tpu_custom_call.1} parent=11 // pred_region
          _
        $region28: #{tpu_custom_call.1} parent=11 // pred_fallthru
          _
        // Predicated region
        $region29: #{tpu_custom_call.1} parent=11 // pred_check
          %p509 = pneg %p162
        $region30: #{tpu_custom_call.1} parent=11 // pred_check_branch
          %511 = sbr.rel (%p509) target = $region32
        $region31: #{tpu_custom_call.1} parent=11 // pred_region
          %513 = vsyncadd [#allocation3], 0
          %s515 = sshll.u32 %s5, 4
          %s516 = int_to_ptr.hbm [resolvable:$true] %s515
          %s517 = sshll.u32 [#allocation2], 4
          %s518 = int_to_ptr.vmem [resolvable:$true] %s517
          %520 = dma.hbm_to_vmem [thread:$0]  %s516, 16, %s518, [#allocation3]
        $region32: #{tpu_custom_call.1} parent=11 // pred_fallthru
          _
        // Predicated region
        $region33: #{tpu_custom_call.1} parent=11 // pred_check
          %p521 = pneg %p183
        $region34: #{tpu_custom_call.1} parent=11 // pred_check_branch
          %523 = sbr.rel (%p521) target = $region36
        $region35: #{tpu_custom_call.1} parent=11 // pred_region
          _
        $region36: #{tpu_custom_call.1} parent=11 // pred_fallthru
          _
        // Predicated region
        $region37: #{tpu_custom_call.1} parent=11 // pred_check
          %p524 = pneg %p204
        $region38: #{tpu_custom_call.1} parent=11 // pred_check_branch
          %526 = sbr.rel (%p524) target = $region40
        $region39: #{tpu_custom_call.1} parent=11 // pred_region
          %528 = vsyncadd [#allocation6], 0
          %s530 = sshll.u32 %s7, 4
          %s531 = int_to_ptr.hbm [resolvable:$true] %s530
          %s532 = sshll.u32 [#allocation5], 4
          %s533 = int_to_ptr.vmem [resolvable:$true] %s532
          %535 = dma.hbm_to_vmem [thread:$0]  %s531, 16, %s533, [#allocation6]
        $region40: #{tpu_custom_call.1} parent=11 // pred_fallthru
          _
        // Predicated region
        $region41: #{tpu_custom_call.1} parent=11 // pred_check
          %p536 = pneg %p225
        $region42: #{tpu_custom_call.1} parent=11 // pred_check_branch
          %538 = sbr.rel (%p536) target = $region44
        $region43: #{tpu_custom_call.1} parent=11 // pred_region
          _
        $region44: #{tpu_custom_call.1} parent=11 // pred_fallthru
          _
        // Predicated region
        $region45: #{tpu_custom_call.1} parent=11 // pred_check
          %p539 = pneg %p246
        $region46: #{tpu_custom_call.1} parent=11 // pred_check_branch
          %541 = sbr.rel (%p539) target = $region48
        $region47: #{tpu_custom_call.1} parent=11 // pred_region
          _
        $region48: #{tpu_custom_call.1} parent=11 // pred_fallthru
          _
        // Predicated region
        $region49: #{tpu_custom_call.1} parent=11 // pred_check
          %p542 = pneg %p267
        $region50: #{tpu_custom_call.1} parent=11 // pred_check_branch
          %544 = sbr.rel (%p542) target = $region52
        $region51: #{tpu_custom_call.1} parent=11 // pred_region
          _
        $region52: #{tpu_custom_call.1} parent=11 // pred_fallthru
          _
        // Predicated region
        $region53: #{tpu_custom_call.1} parent=11 // pred_check
          %p545 = pneg %p288
        $region54: #{tpu_custom_call.1} parent=11 // pred_check_branch
          %547 = sbr.rel (%p545) target = $region56
        $region55: #{tpu_custom_call.1} parent=11 // pred_region
          %549 = vsyncadd [#allocation6], 0
          %s550 = sshll.u32 %s11, 4
          %s551 = int_to_ptr.hbm [resolvable:$true] %s550
          %s552 = sshll.u32 [#allocation7], 4
          %s553 = int_to_ptr.vmem [resolvable:$true] %s552
          %558 = dma.hbm_to_vmem [thread:$0]  %s551, 128, %s553, [#allocation6], 64, 64, 4
        $region56: #{tpu_custom_call.1} parent=11 // pred_fallthru
          _
        // Predicated region
        $region57: #{tpu_custom_call.1} parent=11 // pred_check
          %p559 = pneg %p309
        $region58: #{tpu_custom_call.1} parent=11 // pred_check_branch
          %561 = sbr.rel (%p559) target = $region60
        $region59: #{tpu_custom_call.1} parent=11 // pred_region
          _
        $region60: #{tpu_custom_call.1} parent=11 // pred_fallthru
          _
        // Predicated region
        $region61: #{tpu_custom_call.1} parent=11 // pred_check
          %p562 = pneg %p330
        $region62: #{tpu_custom_call.1} parent=11 // pred_check_branch
          %564 = sbr.rel (%p562) target = $region64
        $region63: #{tpu_custom_call.1} parent=11 // pred_region
          _
        $region64: #{tpu_custom_call.1} parent=11 // pred_fallthru
          _
        // Predicated region
        $region65: #{tpu_custom_call.1} parent=11 // pred_check
          %p565 = pneg %p351
        $region66: #{tpu_custom_call.1} parent=11 // pred_check_branch
          %567 = sbr.rel (%p565) target = $region68
        $region67: #{tpu_custom_call.1} parent=11 // pred_region
          _
        $region68: #{tpu_custom_call.1} parent=11 // pred_fallthru
          _
        // Predicated region
        $region69: #{tpu_custom_call.1} parent=11 // pred_check
          %p568 = pneg %p372
        $region70: #{tpu_custom_call.1} parent=11 // pred_check_branch
          %570 = sbr.rel (%p568) target = $region72
        $region71: #{tpu_custom_call.1} parent=11 // pred_region
          _
        $region72: #{tpu_custom_call.1} parent=11 // pred_fallthru
          _
        // Predicated region
        $region73: #{tpu_custom_call.1} parent=11 // pred_check
          %p571 = pneg %p393
        $region74: #{tpu_custom_call.1} parent=11 // pred_check_branch
          %573 = sbr.rel (%p571) target = $region76
        $region75: #{tpu_custom_call.1} parent=11 // pred_region
          _
        $region76: #{tpu_custom_call.1} parent=11 // pred_fallthru
          _
        // Predicated region
        $region77: #{tpu_custom_call.1} parent=11 // pred_check
          %p574 = pneg %p414
        $region78: #{tpu_custom_call.1} parent=11 // pred_check_branch
          %576 = sbr.rel (%p574) target = $region80
        $region79: #{tpu_custom_call.1} parent=11 // pred_region
          _
        $region80: #{tpu_custom_call.1} parent=11 // pred_fallthru
          _
        // Predicated region
        $region81: #{tpu_custom_call.1} parent=11 // pred_check
          %p577 = pneg %p435
        $region82: #{tpu_custom_call.1} parent=11 // pred_check_branch
          %579 = sbr.rel (%p577) target = $region84
        $region83: #{tpu_custom_call.1} parent=11 // pred_region
          _
        $region84: #{tpu_custom_call.1} parent=11 // pred_fallthru
          _
        // Predicated region
        $region85: #{tpu_custom_call.1} parent=11 // pred_check
          %p580 = pneg %p456
        $region86: #{tpu_custom_call.1} parent=11 // pred_check_branch
          %582 = sbr.rel (%p580) target = $region88
        $region87: #{tpu_custom_call.1} parent=11 // pred_region
          _
        $region88: #{tpu_custom_call.1} parent=11 // pred_fallthru
          _
      $region12: #{tpu_custom_call.1} parent=5 // pred_fallthru
        _
      %p583 = scmp.lt.s32.totalorder %s31, 2
      // Predicated region
      $region89: #{tpu_custom_call.1} parent=5 // pred_check
        %p584 = pneg %p583
      $region90: #{tpu_custom_call.1} parent=5 // pred_check_branch
        %586 = sbr.rel (%p584) target = $region92
      $region91: #{tpu_custom_call.1} parent=5 // pred_region
        // Predicated region
        $region93: #{tpu_custom_call.1} parent=91 // pred_check
          %p587 = pneg %p51
        $region94: #{tpu_custom_call.1} parent=91 // pred_check_branch
          %589 = sbr.rel (%p587) target = $region96
        $region95: #{tpu_custom_call.1} parent=91 // pred_region
          %p590 = scmp.lt.s32.totalorder %s31, 1
          %s591 = scalar_select %p590, %s31, 1
          %s592 = smul.addr %s591, 2
          %s593 = smul.addr %s592, 8
          %s594 = scalar_lea.vmem %s0, %s593
        $region96: #{tpu_custom_call.1} parent=91 // pred_fallthru
          _
      $region92: #{tpu_custom_call.1} parent=5 // pred_fallthru
        _
      %p595 = scmp.le.s32.totalorder 1, %s31
      %p596 = scmp.lt.s32.totalorder %s31, 3
      %p597 = pnand %p595, %p596
      %p598 = pneg %p597
      // Predicated region
      $region97: #{tpu_custom_call.1} parent=5 // pred_check
        _
      $region98: #{tpu_custom_call.1} parent=5 // pred_check_branch
        %600 = sbr.rel (%p597) target = $region100
      $region99: #{tpu_custom_call.1} parent=5 // pred_region
        %s601 = ssub.s32 %s31, 1
        // Predicated region
        $region101: #{tpu_custom_call.1} parent=99 // pred_check
          %p602 = pneg %p162
        $region102: #{tpu_custom_call.1} parent=99 // pred_check_branch
          %604 = sbr.rel (%p602) target = $region104
        $region103: #{tpu_custom_call.1} parent=99 // pred_region
          %606 = dma.done [#allocation3], 16
        $region104: #{tpu_custom_call.1} parent=99 // pred_fallthru
          _
        // Predicated region
        $region105: #{tpu_custom_call.1} parent=99 // pred_check
          %p607 = pneg %p204
        $region106: #{tpu_custom_call.1} parent=99 // pred_check_branch
          %609 = sbr.rel (%p607) target = $region108
        $region107: #{tpu_custom_call.1} parent=99 // pred_region
          %611 = dma.done [#allocation6], 16
        $region108: #{tpu_custom_call.1} parent=99 // pred_fallthru
          _
        // Predicated region
        $region109: #{tpu_custom_call.1} parent=99 // pred_check
          %p612 = pneg %p288
        $region110: #{tpu_custom_call.1} parent=99 // pred_check_branch
          %614 = sbr.rel (%p612) target = $region112
        $region111: #{tpu_custom_call.1} parent=99 // pred_region
          %616 = dma.done [#allocation6], 128
        $region112: #{tpu_custom_call.1} parent=99 // pred_fallthru
          _
        %p617 = scmp.lt.s32.totalorder %s36, 1
        %s618 = scalar_select %p617, %s36, 1
        %s619 = smul.addr %s618, 2
        %s620 = smul.addr %s619, 8
        %s621 = scalar_lea.vmem %s0, %s620
        %p622 = pneg %p57
        %p623 = pneg %p54
        %p624 = pneg %p78
        %p625 = pneg %p75
        %p626 = pneg %p99
        %p627 = pneg %p96
        %p628 = pneg %p120
        %p629 = pneg %p117
        %p630 = pneg %p141
        %p631 = pneg %p138
        %p632 = pneg %p162
        %p633 = pneg %p159
        %p634 = pneg %p183
        %p635 = pneg %p180
        %p636 = pneg %p204
        %p637 = pneg %p201
        %p638 = pneg %p225
        %p639 = pneg %p222
        %p640 = pneg %p246
        %p641 = pneg %p243
        %p642 = pneg %p267
        %p643 = pneg %p264
        %p644 = pneg %p288
        %p645 = pneg %p285
        %p646 = pneg %p309
        %p647 = pneg %p306
        %p648 = pneg %p330
        %p649 = pneg %p327
        %p650 = pneg %p351
        %p651 = pneg %p348
        %p652 = pneg %p372
        %p653 = pneg %p369
        %p654 = pneg %p393
        %p655 = pneg %p390
        %p656 = pneg %p414
        %p657 = pneg %p411
        %p658 = pneg %p435
        %p659 = pneg %p432
        %p660 = pneg %p456
        %p661 = pneg %p453
        %p662 = pneg %p482
        %p663 = pneg %p479
        %s664 = sand.u32 %s469, 1
        %s665 = scalar_lea.sflag [#allocation4], %s664
        %s666 = sand.u32 %s469, 1
        %s667 = smul.addr %s666, 32
        %s668 = scalar_lea.vmem [#allocation8], %s667
        %p669 = scmp.lt.s32.totalorder %s36, 1
        %s670 = scalar_select %p669, %s36, 1
        %s671 = smul.addr %s670, 2
        %s672 = smul.addr %s671, 8
        %s673 = scalar_lea.vmem %s0, %s672
        %675 = vst [vmem:[%s668] sm:$0xff] 0.0
        %676 = vst [vmem:[%s668 + $0x8] sm:$0xff] 0.0
        %677 = vst [vmem:[%s668 + $0x10] sm:$0xff] 0.0
        %678 = vst [vmem:[%s668 + $0x18] sm:$0xff] 0.0
        %v679 = vld [vmem:[%s673] sm:$0xff]
        %v680 = vld [vmem:[%s673 + $0x8] sm:$0xff]
        %v681 = vld [vmem:[%s1] sm:$0xf]
        %v682 = vld [vmem:[%s1 + $0x4] sm:$0xf]
        %v683 = vld [vmem:[%s1 + $0x8] sm:$0xf]
        %v684 = vld [vmem:[%s1 + $0xc] sm:$0xf]
        %v685 = vld [vmem:[%s1 + $0x10] sm:$0xf]
        %v686 = vld [vmem:[%s1 + $0x14] sm:$0xf]
        %v687 = vpack.c.bf16 %v680, %v679
        %v688 = vld [vmem:[%s2] sm:$0x1]
        %v690 = vperm.slane %v688, 0
        %v698 = vunpack.c.l.b16 %v681
        %v699 = vunpack.c.l.b16 %v682
        %v700 = vunpack.c.l.b16 %v683
        %v701 = vunpack.c.l.b16 %v684
        %v702 = vunpack.c.l.b16 %v685
        %v703 = vunpack.c.l.b16 %v686
        %v704 = vpack.c.b16 %v699, %v698
        %v705 = vpack.c.b16 %v701, %v700
        %v706 = vpack.c.b16 %v703, %v702
        %vm710 = vcmask 392192
        %v712 = vsel %vm710, %v687, 0
        %714 = vmatpush.bf16.msra.mxu0 0
        %715 = vmatpush.bf16.msra.mxu0 0
        %716 = vmatpush.bf16.msra.mxu0 0
        %717 = vmatpush.bf16.msra.mxu0 0
        %718 = vmatpush.bf16.msra.mxu0 0
        %719 = vmatpush.bf16.msra.mxu0 %v706
        %720 = vmatpush.bf16.msra.mxu0 %v705
        %721 = vmatpush.bf16.msra.mxu0 %v704
        %722 = vmatmul.bf16.gmra.mxu0 %v712
        %v723 = vpop.f32.mrf.mxu0
        %v724 = vadd.f32 %v690, %v723
        %v725 = vpop.f32.mrf.mxu0
        %v726 = vadd.f32 %v690, %v725
        %727 = vdwg.mxu0
        %v728 = vmax.f32 %v724, 0.0
        %v729 = vmax.f32 %v726, 0.0
        %v730 = vld [vmem:[%s4] sm:$0xf]
        %v731 = vld [vmem:[%s4 + $0x4] sm:$0xf]
        %v732 = vld [vmem:[%s4 + $0x8] sm:$0xf]
        %v733 = vld [vmem:[%s4 + $0xc] sm:$0xf]
        %v734 = vpack.c.bf16 %v729, %v728
        %v735 = vld [vmem:[#allocation2] sm:$0x1]
        %v737 = vperm.slane %v735, 0
        %v743 = vunpack.c.l.b16 %v730
        %v744 = vunpack.c.l.b16 %v731
        %v745 = vunpack.c.l.b16 %v732
        %v746 = vunpack.c.l.b16 %v733
        %v747 = vpack.c.b16 %v744, %v743
        %v748 = vpack.c.b16 %v746, %v745
        %vm751 = vcmask 261120
        %v753 = vsel %vm751, %v734, 0
        %755 = vmatpush.bf16.msra.mxu0 0
        %756 = vmatpush.bf16.msra.mxu0 0
        %757 = vmatpush.bf16.msra.mxu0 0
        %758 = vmatpush.bf16.msra.mxu0 0
        %759 = vmatpush.bf16.msra.mxu0 0
        %760 = vmatpush.bf16.msra.mxu0 0
        %761 = vmatpush.bf16.msra.mxu0 %v748
        %762 = vmatpush.bf16.msra.mxu0 %v747
        %763 = vmatmul.bf16.gmra.mxu0 %v753
        %v764 = vpop.f32.mrf.mxu0
        %v765 = vadd.f32 %v737, %v764
        %v766 = vpop.f32.mrf.mxu0
        %v767 = vadd.f32 %v737, %v766
        %768 = vdwg.mxu0
        %v769 = vld [vmem:[%s3] sm:$0xf]
        %v770 = vld [vmem:[%s3 + $0x4] sm:$0x1]
        %v771 = vpack.c.bf16 %v767, %v765
        %v774 = vunpack.c.l.b16 %v769
        %v775 = vunpack.c.l.b16 %v770
        %v776 = vpack.c.b16 %v775, %v774
        %v778 = vsel %vm751, %v776, 0
        %v781 = vsel %vm751, %v771, 0
        %783 = vmatpush.bf16.xpose.msra.mxu0 0
        %784 = vmatpush.bf16.xpose.msra.mxu0 0
        %785 = vmatpush.bf16.xpose.msra.mxu0 0
        %786 = vmatpush.bf16.xpose.msra.mxu0 0
        %787 = vmatpush.bf16.xpose.msra.mxu0 0
        %788 = vmatpush.bf16.xpose.msra.mxu0 0
        %789 = vmatpush.bf16.xpose.msra.mxu0 0
        %790 = vmatpush.bf16.xpose.msra.mxu0 %v781
        %791 = vmatmul.bf16.gmra.mxu0 %v778
        %v792 = vpop.f32.mrf.mxu0
        %v793 = vadd.f32 0.0, %v792
        %v794 = vpop.f32.mrf.mxu0
        %v795 = vadd.f32 0.0, %v794
        %796 = vdwg.mxu0
        %v797 = vmul.f32 %v793, 0.17677669
        %v798 = vmul.f32 %v795, 0.17677669
        %vm799 = vcmask 130048
        %v800 = vsel %vm799, %v797, -inf
        %801 = vmax.xlane.f32.xlu0 %v800
        %v802 = vpop.xlane.xlu0 %801
        %vm803 = vcmask 122880
        %v804 = vsel %vm803, %v798, -inf
        %805 = vmax.xlane.f32.xlu0 %v804
        %v806 = vpop.xlane.xlu0 %805
        %v807 = vsub.f32 %v797, %v802
        %v808 = vsub.f32 %v798, %v806
        %v809 = vmul.f32 %v807, 1.442695
        %v810 = vpow.pop %v809
        %v811 = vmul.f32 %v808, 1.442695
        %v812 = vpow.pop %v811
        %v813 = vsel %vm799, %v810, 0.0
        %814 = vadd.xlane.f32.xlu0 %v813
        %v815 = vpop.xlane.xlu0 %814
        %v816 = vsel %vm803, %v812, 0.0
        %817 = vadd.xlane.f32.xlu0 %v816
        %v818 = vpop.xlane.xlu0 %817
        %v819 = vrcp.pop %v815
        %v820 = vrcp.pop %v818
        %v821 = vmul.f32 %v810, %v819
        %v822 = vmul.f32 %v812, %v820
        %v823 = vpack.c.bf16 %v822, %v821
        %825 = vrot.lane.b32.xlu0 %v771, 96
        %v826 = vpop.permute.xlu0 %825
        %v829 = vsel %vm799, %v823, 0
        %831 = vmatpush.bf16.msra.mxu0 0
        %832 = vmatpush.bf16.msra.mxu0 0
        %833 = vmatpush.bf16.msra.mxu0 0
        %834 = vmatpush.bf16.msra.mxu0 0
        %835 = vmatpush.bf16.msra.mxu0 0
        %836 = vmatpush.bf16.msra.mxu0 0
        %837 = vmatpush.bf16.msra.mxu0 0
        %838 = vmatpush.bf16.msra.mxu0 %v826
        %839 = vmatmul.bf16.gmra.mxu0 %v829
        %v840 = vpop.f32.mrf.mxu0
        %v841 = vadd.f32 0.0, %v840
        %v842 = vpop.f32.mrf.mxu0
        %v843 = vadd.f32 0.0, %v842
        %844 = vdwg.mxu0
        %v845 = vld [vmem:[%s6] sm:$0xf]
        %v846 = vld [vmem:[%s6 + $0x4] sm:$0xf]
        %v847 = vld [vmem:[%s6 + $0x8] sm:$0xf]
        %v848 = vld [vmem:[%s6 + $0xc] sm:$0xf]
        %v849 = vpack.c.bf16 %v843, %v841
        %v850 = vld [vmem:[#allocation5] sm:$0x1]
        %v852 = vperm.slane %v850, 0
        %v858 = vunpack.c.l.b16 %v845
        %v859 = vunpack.c.l.b16 %v846
        %v860 = vunpack.c.l.b16 %v847
        %v861 = vunpack.c.l.b16 %v848
        %v862 = vpack.c.b16 %v859, %v858
        %v863 = vpack.c.b16 %v861, %v860
        %v867 = vsel %vm751, %v849, 0
        %869 = vmatpush.bf16.msra.mxu0 0
        %870 = vmatpush.bf16.msra.mxu0 0
        %871 = vmatpush.bf16.msra.mxu0 0
        %872 = vmatpush.bf16.msra.mxu0 0
        %873 = vmatpush.bf16.msra.mxu0 0
        %874 = vmatpush.bf16.msra.mxu0 0
        %875 = vmatpush.bf16.msra.mxu0 %v863
        %876 = vmatpush.bf16.msra.mxu0 %v862
        %877 = vmatmul.bf16.gmra.mxu0 %v867
        %v878 = vpop.f32.mrf.mxu0
        %v879 = vadd.f32 %v852, %v878
        %v880 = vpop.f32.mrf.mxu0
        %v881 = vadd.f32 %v852, %v880
        %882 = vdwg.mxu0
        %883 = vst.msk [vmem:[%s668] sm:$0xff] %vm751, %v728
        %884 = vst.msk [vmem:[%s668 + $0x10] sm:$0xff] %vm751, %v729
        %887 = vrot.lane.b32.xlu0 %v821, 32
        %v888 = vpop.permute.xlu0 %887
        %889 = vrot.lane.b32.xlu0 %v822, 32
        %v890 = vpop.permute.xlu0 %889
        %895 = vrot.lane.b32.xlu0 %v879, 48
        %v896 = vpop.permute.xlu0 %895
        %897 = vrot.lane.b32.xlu0 %v881, 48
        %v898 = vpop.permute.xlu0 %897
        %v901 = vsel %vm751, %v841, %v888
        %v902 = vsel %vm751, %v843, %v890
        %v903 = vsel %vm710, %v901, %v896
        %v904 = vsel %vm710, %v902, %v898
        %907 = vrot.lane.b32.xlu0 %v903, 32
        %v908 = vpop.permute.xlu0 %907
        %909 = vrot.lane.b32.xlu0 %v904, 32
        %v910 = vpop.permute.xlu0 %909
        %vm913 = vcmask 720128
        %914 = vst.msk [vmem:[%s668] sm:$0xff] %vm913, %v908
        %vm915 = vcmask 712960
        %916 = vst.msk [vmem:[%s668 + $0x10] sm:$0x1] %vm915, %v910
        %v917 = vlaneseq
        %v918 = vshrl.u32 %v917, 7
        %v919 = vadd.s32 %v918, 8
        %v920 = vlaneseq
        %v921 = vand.u32 %v920, 127
        %vm922 = vcmp.eq.s32.totalorder %v918, %v921
        %vm923 = vcmp.eq.s32.totalorder %v919, %v921
        %v924 = vsel %vm922, -1e+09, 0.0
        %v925 = vsel %vm923, -1e+09, 0.0
        %vm926 = vcmask 64512
        %v927 = vsel %vm926, %v879, -inf
        %928 = vmax.xlane.f32.xlu0 %v927
        %v929 = vpop.xlane.xlu0 %928
        %vm930 = vcmask 57344
        %v931 = vsel %vm930, %v881, -inf
        %932 = vmax.xlane.f32.xlu0 %v931
        %v933 = vpop.xlane.xlu0 %932
        %vm934 = vcmp.ge.f32.partialorder %v879, %v929
        %vm935 = vcmp.ge.f32.partialorder %v881, %v933
        %v936 = vadd.s32 %v918, 1
        %v937 = vadd.s32 %v919, 1
        %v938 = vsel %vm934, %v936, 9
        %v939 = vsel %vm935, %v937, 9
        %vm940 = vcmask 7168
        %v941 = vsel %vm940, %v938, 2147483647
        %vm942 = vcmask 0
        %v943 = vsel %vm942, %v939, 2147483647
        %vm944 = vcmp.lt.s32.totalorder %v941, %v943
        %v945 = vsel %vm944, %v941, %v943
        %v946 = vrot.slane %v945, 4
        %vm947 = vcmp.lt.s32.totalorder %v945, %v946
        %v948 = vsel %vm947, %v945, %v946
        %v949 = vrot.slane %v948, 2
        %vm950 = vcmp.lt.s32.totalorder %v948, %v949
        %v951 = vsel %vm950, %v948, %v949
        %v952 = vrot.slane %v951, 1
        %vm953 = vcmp.lt.s32.totalorder %v951, %v952
        %v954 = vsel %vm953, %v951, %v952
        %vm955 = vcmp.gt.s32.totalorder %v954, 2
        %v956 = vsel %vm955, %v954, 2
        %vm957 = vcmp.lt.s32.totalorder %v956, 9
        %v958 = vsel %vm957, %v956, 9
        %v959 = vsub.f32 %v879, %v929
        %v960 = vsub.f32 %v881, %v933
        %v961 = vmul.f32 %v959, 1.442695
        %v962 = vpow.pop %v961
        %v963 = vmul.f32 %v960, 1.442695
        %v964 = vpow.pop %v963
        %v965 = vsel %vm926, %v962, 0.0
        %966 = vadd.xlane.f32.xlu0 %v965
        %v967 = vpop.xlane.xlu0 %966
        %v968 = vsel %vm930, %v964, 0.0
        %969 = vadd.xlane.f32.xlu0 %v968
        %v970 = vpop.xlane.xlu0 %969
        %v971 = vrcp.pop %v967
        %v972 = vrcp.pop %v970
        %v973 = vmul.f32 %v962, %v971
        %v974 = vmul.f32 %v964, %v972
        %v975 = vld [vmem:[%s8] sm:$0xf]
        %v976 = vpack.c.bf16 %v974, %v973
        %v977 = vld [vmem:[%s9] sm:$0x1]
        %v979 = vperm.slane %v977, 0
        %v982 = vsel %vm926, %v976, 0
        %vm984 = vcmask 1043456
        %v986 = vsel %vm984, %v975, 0
        %988 = vmatpush.bf16.msra.mxu0 0
        %989 = vmatpush.bf16.msra.mxu0 0
        %990 = vmatpush.bf16.msra.mxu0 0
        %991 = vmatpush.bf16.msra.mxu0 0
        %992 = vmatpush.bf16.msra.mxu0 0
        %993 = vmatpush.bf16.msra.mxu0 0
        %994 = vmatpush.bf16.msra.mxu0 0
        %995 = vmatpush.bf16.msra.mxu0 %v986
        %996 = vmatmul.bf16.gmra.mxu0 %v982
        %v997 = vpop.f32.mrf.mxu0
        %v998 = vadd.f32 %v979, %v997
        %v999 = vpop.f32.mrf.mxu0
        %v1000 = vadd.f32 %v979, %v999
        %1001 = vdwg.mxu0
        %v1002 = vld [vmem:[%s10] sm:$0xff]
        %v1003 = vld [vmem:[%s10 + $0x8] sm:$0x1]
        %v1004 = vadd.f32 %v998, %v1002
        %v1005 = vadd.f32 %v1000, %v1003
        %v1006 = vld [vmem:[#allocation7] sm:$0xf]
        %v1007 = vld [vmem:[#allocation7 + $0x4] sm:$0x1]
        %v1008 = vpack.c.bf16 %v1005, %v1004
        %v1011 = vunpack.c.l.b16 %v1006
        %v1012 = vunpack.c.l.b16 %v1007
        %v1013 = vpack.c.b16 %v1012, %v1011
        %v1015 = vsel %vm751, %v1013, 0
        %v1018 = vsel %vm751, %v1008, 0
        %1020 = vmatpush.bf16.xpose.msra.mxu0 0
        %1021 = vmatpush.bf16.xpose.msra.mxu0 0
        %1022 = vmatpush.bf16.xpose.msra.mxu0 0
        %1023 = vmatpush.bf16.xpose.msra.mxu0 0
        %1024 = vmatpush.bf16.xpose.msra.mxu0 0
        %1025 = vmatpush.bf16.xpose.msra.mxu0 0
        %1026 = vmatpush.bf16.xpose.msra.mxu0 0
        %1027 = vmatpush.bf16.xpose.msra.mxu0 %v1018
        %1028 = vmatmul.bf16.gmra.mxu0 %v1015
        %v1029 = vpop.f32.mrf.mxu0
        %v1030 = vadd.f32 0.0, %v1029
        %v1031 = vpop.f32.mrf.mxu0
        %v1032 = vadd.f32 0.0, %v1031
        %1033 = vdwg.mxu0
        %v1034 = vmul.f32 %v1030, 0.17677669
        %v1035 = vmul.f32 %v1032, 0.17677669
        %1036 = vset.pattern.permute.xlu0 0
        %1037 = vperm.xlu0 %1036, %v958
        %v1038 = vpop.permute.xlu0 %1037
        %vm1039 = vcmp.lt.s32.totalorder %v921, %v1038
        %v1040 = vsel %vm1039, 0.0, -1e+09
        %v1041 = vadd.f32 %v1034, %v1040
        %v1042 = vadd.f32 %v1035, %v1040
        %v1043 = vadd.f32 %v1041, %v924
        %v1044 = vadd.f32 %v1042, %v925
        %vm1045 = vcmask 72704
        %v1046 = vsel %vm1045, %v1043, -inf
        %1047 = vmax.xlane.f32.xlu0 %v1046
        %v1048 = vpop.xlane.xlu0 %1047
        %vm1049 = vcmask 65536
        %v1050 = vsel %vm1049, %v1044, -inf
        %1051 = vmax.xlane.f32.xlu0 %v1050
        %v1052 = vpop.xlane.xlu0 %1051
        %v1053 = vsub.f32 %v1043, %v1048
        %v1054 = vsub.f32 %v1044, %v1052
        %v1055 = vmul.f32 %v1053, 1.442695
        %v1056 = vpow.pop %v1055
        %v1057 = vmul.f32 %v1054, 1.442695
        %v1058 = vpow.pop %v1057
        %v1059 = vsel %vm1045, %v1056, 0.0
        %1060 = vadd.xlane.f32.xlu0 %v1059
        %v1061 = vpop.xlane.xlu0 %1060
        %v1062 = vsel %vm1049, %v1058, 0.0
        %1063 = vadd.xlane.f32.xlu0 %v1062
        %v1064 = vpop.xlane.xlu0 %1063
        %v1065 = vrcp.pop %v1061
        %v1066 = vrcp.pop %v1064
        %v1067 = vmul.f32 %v1056, %v1065
        %v1068 = vmul.f32 %v1058, %v1066
        %v1069 = vpack.c.bf16 %v1068, %v1067
        %v1071 = vsel %vm1045, %v1069, 0
        %vm1073 = vcmask 1044480
        %v1074 = vsel %vm984, 4294967295, 65535
        %v1075 = vsel %vm1073, %v1074, 0
        %v1076 = vand.u32 %v1008, %v1075
        %1078 = vmatpush.bf16.msra.mxu0 0
        %1079 = vmatpush.bf16.msra.mxu0 0
        %1080 = vmatpush.bf16.msra.mxu0 0
        %1081 = vmatpush.bf16.msra.mxu0 0
        %1082 = vmatpush.bf16.msra.mxu0 0
        %1083 = vmatpush.bf16.msra.mxu0 0
        %1084 = vmatpush.bf16.msra.mxu0 0
        %1085 = vmatpush.bf16.msra.mxu0 %v1076
        %1086 = vmatmul.bf16.gmra.mxu0 %v1071
        %v1087 = vpop.f32.mrf.mxu0
        %v1088 = vadd.f32 0.0, %v1087
        %v1089 = vpop.f32.mrf.mxu0
        %v1090 = vadd.f32 0.0, %v1089
        %1091 = vdwg.mxu0
        %v1092 = vld [vmem:[%s12] sm:$0xf]
        %v1093 = vld [vmem:[%s12 + $0x4] sm:$0xf]
        %v1094 = vld [vmem:[%s12 + $0x8] sm:$0xf]
        %v1095 = vld [vmem:[%s12 + $0xc] sm:$0xf]
        %v1096 = vpack.c.bf16 %v1090, %v1088
        %v1097 = vld [vmem:[%s13] sm:$0x1]
        %v1099 = vperm.slane %v1097, 0
        %v1105 = vunpack.c.l.b16 %v1092
        %v1106 = vunpack.c.l.b16 %v1093
        %v1107 = vunpack.c.l.b16 %v1094
        %v1108 = vunpack.c.l.b16 %v1095
        %v1109 = vpack.c.b16 %v1106, %v1105
        %v1110 = vpack.c.b16 %v1108, %v1107
        %v1114 = vsel %vm751, %v1096, 0
        %1116 = vmatpush.bf16.msra.mxu0 0
        %1117 = vmatpush.bf16.msra.mxu0 0
        %1118 = vmatpush.bf16.msra.mxu0 0
        %1119 = vmatpush.bf16.msra.mxu0 0
        %1120 = vmatpush.bf16.msra.mxu0 0
        %1121 = vmatpush.bf16.msra.mxu0 0
        %1122 = vmatpush.bf16.msra.mxu0 %v1110
        %1123 = vmatpush.bf16.msra.mxu0 %v1109
        %1124 = vmatmul.bf16.gmra.mxu0 %v1114
        %v1125 = vpop.f32.mrf.mxu0
        %v1126 = vadd.f32 %v1099, %v1125
        %v1127 = vpop.f32.mrf.mxu0
        %v1128 = vadd.f32 %v1099, %v1127
        %1129 = vdwg.mxu0
        %v1130 = vld [vmem:[%s14] sm:$0xff]
        %v1131 = vld [vmem:[%s14 + $0x8] sm:$0x1]
        %v1132 = vadd.f32 %v1088, %v1130
        %v1133 = vadd.f32 %v1090, %v1131
        %v1134 = vld [vmem:[%s15] sm:$0xff]
        %v1135 = vld [vmem:[%s15 + $0x8] sm:$0xff]
        %v1136 = vadd.f32 %v728, %v1134
        %v1137 = vadd.f32 %v729, %v1135
        %v1138 = vpack.c.bf16 %v1133, %v1132
        %v1139 = vpack.c.bf16 %v1137, %v1136
        %v1141 = vsel %vm751, %v1138, 0
        %v1144 = vsel %vm751, %v1139, 0
        %1146 = vmatpush.bf16.xpose.msra.mxu0 0
        %1147 = vmatpush.bf16.xpose.msra.mxu0 0
        %1148 = vmatpush.bf16.xpose.msra.mxu0 0
        %1149 = vmatpush.bf16.xpose.msra.mxu0 0
        %1150 = vmatpush.bf16.xpose.msra.mxu0 0
        %1151 = vmatpush.bf16.xpose.msra.mxu0 0
        %1152 = vmatpush.bf16.xpose.msra.mxu0 0
        %1153 = vmatpush.bf16.xpose.msra.mxu0 %v1144
        %1154 = vmatmul.bf16.gmra.mxu0 %v1141
        %v1155 = vpop.f32.mrf.mxu0
        %v1156 = vadd.f32 0.0, %v1155
        %v1157 = vpop.f32.mrf.mxu0
        %v1158 = vadd.f32 0.0, %v1157
        %1159 = vdwg.mxu0
        %v1160 = vmul.f32 %v1156, 0.17677669
        %v1161 = vmul.f32 %v1158, 0.17677669
        %v1162 = vsel %vm799, %v1160, -inf
        %1163 = vmax.xlane.f32.xlu0 %v1162
        %v1164 = vpop.xlane.xlu0 %1163
        %v1165 = vsel %vm803, %v1161, -inf
        %1166 = vmax.xlane.f32.xlu0 %v1165
        %v1167 = vpop.xlane.xlu0 %1166
        %v1168 = vsub.f32 %v1160, %v1164
        %v1169 = vsub.f32 %v1161, %v1167
        %v1170 = vmul.f32 %v1168, 1.442695
        %v1171 = vpow.pop %v1170
        %v1172 = vmul.f32 %v1169, 1.442695
        %v1173 = vpow.pop %v1172
        %v1174 = vsel %vm799, %v1171, 0.0
        %1175 = vadd.xlane.f32.xlu0 %v1174
        %v1176 = vpop.xlane.xlu0 %1175
        %v1177 = vsel %vm803, %v1173, 0.0
        %1178 = vadd.xlane.f32.xlu0 %v1177
        %v1179 = vpop.xlane.xlu0 %1178
        %v1180 = vrcp.pop %v1176
        %v1181 = vrcp.pop %v1179
        %v1182 = vmul.f32 %v1171, %v1180
        %v1183 = vmul.f32 %v1173, %v1181
        %v1184 = vpack.c.bf16 %v1183, %v1182
        %v1186 = vsel %vm799, %v1184, 0
        %1188 = vmatpush.bf16.msra.mxu0 0
        %1189 = vmatpush.bf16.msra.mxu0 0
        %1190 = vmatpush.bf16.msra.mxu0 0
        %1191 = vmatpush.bf16.msra.mxu0 0
        %1192 = vmatpush.bf16.msra.mxu0 0
        %1193 = vmatpush.bf16.msra.mxu0 0
        %1194 = vmatpush.bf16.msra.mxu0 0
        %1195 = vmatpush.bf16.msra.mxu0 %v734
        %1196 = vmatmul.bf16.gmra.mxu0 %v1186
        %v1197 = vpop.f32.mrf.mxu0
        %v1198 = vadd.f32 0.0, %v1197
        %v1199 = vpop.f32.mrf.mxu0
        %v1200 = vadd.f32 0.0, %v1199
        %1201 = vdwg.mxu0
        %1202 = vmatpush.bf16.msra.mxu0 0
        %1203 = vmatpush.bf16.msra.mxu0 0
        %1204 = vmatpush.bf16.msra.mxu0 0
        %1205 = vmatpush.bf16.msra.mxu0 0
        %1206 = vmatpush.bf16.msra.mxu0 0
        %1207 = vmatpush.bf16.msra.mxu0 0
        %1208 = vmatpush.bf16.msra.mxu0 0
        %1209 = vmatpush.bf16.msra.mxu0 %v734
        %1210 = vmatmul.bf16.gmra.mxu0 %v829
        %v1211 = vpop.f32.mrf.mxu0
        %v1212 = vadd.f32 %v1198, %v1211
        %v1213 = vpop.f32.mrf.mxu0
        %v1214 = vadd.f32 %v1200, %v1213
        %1215 = vdwg.mxu0
        %1218 = vrot.lane.b32.xlu0 %v1212, 32
        %v1219 = vpop.permute.xlu0 %1218
        %1220 = vrot.lane.b32.xlu0 %v1214, 32
        %v1221 = vpop.permute.xlu0 %1220
        %v1224 = vsel %vm751, %v1088, %v1219
        %v1225 = vsel %vm751, %v1090, %v1221
        %v1226 = vld [vmem:[%s16] sm:$0xf]
        %v1227 = vld [vmem:[%s16 + $0x4] sm:$0xf]
        %v1228 = vld [vmem:[%s16 + $0x8] sm:$0xf]
        %v1229 = vld [vmem:[%s16 + $0xc] sm:$0xf]
        %v1230 = vld [vmem:[%s16 + $0x10] sm:$0xf]
        %v1231 = vld [vmem:[%s16 + $0x14] sm:$0xf]
        %v1232 = vld [vmem:[%s16 + $0x18] sm:$0xf]
        %v1233 = vld [vmem:[%s16 + $0x1c] sm:$0xf]
        %v1234 = vpack.c.bf16 %v1225, %v1224
        %v1235 = vld [vmem:[%s17] sm:$0x1]
        %v1237 = vperm.slane %v1235, 0
        %v1247 = vunpack.c.l.b16 %v1226
        %v1248 = vunpack.c.l.b16 %v1227
        %v1249 = vunpack.c.l.b16 %v1228
        %v1250 = vunpack.c.l.b16 %v1229
        %v1251 = vunpack.c.l.b16 %v1230
        %v1252 = vunpack.c.l.b16 %v1231
        %v1253 = vunpack.c.l.b16 %v1232
        %v1254 = vunpack.c.l.b16 %v1233
        %v1255 = vpack.c.b16 %v1248, %v1247
        %v1256 = vpack.c.b16 %v1250, %v1249
        %v1257 = vpack.c.b16 %v1252, %v1251
        %v1258 = vpack.c.b16 %v1254, %v1253
        %vm1263 = vcmask 523264
        %v1265 = vsel %vm1263, %v1234, 0
        %1267 = vmatpush.bf16.msra.mxu0 0
        %1268 = vmatpush.bf16.msra.mxu0 0
        %1269 = vmatpush.bf16.msra.mxu0 0
        %1270 = vmatpush.bf16.msra.mxu0 0
        %1271 = vmatpush.bf16.msra.mxu0 %v1258
        %1272 = vmatpush.bf16.msra.mxu0 %v1257
        %1273 = vmatpush.bf16.msra.mxu0 %v1256
        %1274 = vmatpush.bf16.msra.mxu0 %v1255
        %1275 = vmatmul.bf16.gmra.mxu0 %v1265
        %v1276 = vpop.f32.mrf.mxu0
        %v1277 = vadd.f32 %v1237, %v1276
        %v1278 = vpop.f32.mrf.mxu0
        %v1279 = vadd.f32 %v1237, %v1278
        %1280 = vdwg.mxu0
        %v1281 = vxor.u32 %v1277, 2147483648
        %v1282 = vxor.u32 %v1279, 2147483648
        %v1283 = vmul.f32 %v1281, 1.442695
        %v1284 = vpow.pop %v1283
        %v1285 = vmul.f32 %v1282, 1.442695
        %v1286 = vpow.pop %v1285
        %v1287 = vadd.f32 %v1284, 1.0
        %v1288 = vadd.f32 %v1286, 1.0
        %v1289 = vrcp.pop %v1287
        %v1290 = vmul.f32 %v1287, %v1289
        %v1291 = vsub.f32 1.0, %v1290
        %v1292 = vmul.f32 %v1289, %v1291
        %v1293 = vadd.f32 %v1289, %v1292
        %vm1294 = vweird.f32 %v1287
        %vm1295 = vweird.f32 %v1289
        %vm1296 = vmor %vm1294, %vm1295
        %v1297 = vsel %vm1296, %v1289, %v1293
        %v1298 = vand.u32 2147483647, %v1287
        %vm1299 = vcmp.eq.f32.partialorder %v1298, 8.507059e+37
        %v1300 = vand.u32 %v1287, 2147483648
        %v1301 = vor.u32 1.1754944e-38, %v1300
        %v1302 = vsel %vm1299, %v1301, %v1297
        %v1303 = vmul.f32 1.0, %v1302
        %v1304 = vrcp.pop %v1288
        %v1305 = vmul.f32 %v1288, %v1304
        %v1306 = vsub.f32 1.0, %v1305
        %v1307 = vmul.f32 %v1304, %v1306
        %v1308 = vadd.f32 %v1304, %v1307
        %vm1309 = vweird.f32 %v1288
        %vm1310 = vweird.f32 %v1304
        %vm1311 = vmor %vm1309, %vm1310
        %v1312 = vsel %vm1311, %v1304, %v1308
        %v1313 = vand.u32 2147483647, %v1288
        %vm1314 = vcmp.eq.f32.partialorder %v1313, 8.507059e+37
        %v1315 = vand.u32 %v1288, 2147483648
        %v1316 = vor.u32 1.1754944e-38, %v1315
        %v1317 = vsel %vm1314, %v1316, %v1312
        %v1318 = vmul.f32 1.0, %v1317
        %v1319 = vmul.f32 %v1303, %v1088
        %v1320 = vmul.f32 %v1318, %v1090
        %v1321 = vsub.f32 1.0, %v1303
        %v1322 = vsub.f32 1.0, %v1318
        %v1323 = vmul.f32 %v1321, %v1212
        %v1324 = vmul.f32 %v1322, %v1214
        %v1325 = vadd.f32 %v1319, %v1323
        %v1326 = vadd.f32 %v1320, %v1324
        %v1327 = vld [vmem:[%s18] sm:$0xf]
        %v1328 = vld [vmem:[%s18 + $0x4] sm:$0xf]
        %v1329 = vld [vmem:[%s18 + $0x8] sm:$0xf]
        %v1330 = vld [vmem:[%s18 + $0xc] sm:$0xf]
        %v1331 = vpack.c.bf16 %v1326, %v1325
        %v1332 = vld [vmem:[%s19] sm:$0x1]
        %v1334 = vperm.slane %v1332, 0
        %v1340 = vunpack.c.l.b16 %v1327
        %v1341 = vunpack.c.l.b16 %v1328
        %v1342 = vunpack.c.l.b16 %v1329
        %v1343 = vunpack.c.l.b16 %v1330
        %v1344 = vpack.c.b16 %v1341, %v1340
        %v1345 = vpack.c.b16 %v1343, %v1342
        %v1349 = vsel %vm751, %v1331, 0
        %1351 = vmatpush.bf16.msra.mxu0 0
        %1352 = vmatpush.bf16.msra.mxu0 0
        %1353 = vmatpush.bf16.msra.mxu0 0
        %1354 = vmatpush.bf16.msra.mxu0 0
        %1355 = vmatpush.bf16.msra.mxu0 0
        %1356 = vmatpush.bf16.msra.mxu0 0
        %1357 = vmatpush.bf16.msra.mxu0 %v1345
        %1358 = vmatpush.bf16.msra.mxu0 %v1344
        %1359 = vmatmul.bf16.gmra.mxu0 %v1349
        %v1360 = vpop.f32.mrf.mxu0
        %v1361 = vadd.f32 %v1334, %v1360
        %v1362 = vpop.f32.mrf.mxu0
        %v1363 = vadd.f32 %v1334, %v1362
        %1364 = vdwg.mxu0
        %1367 = vrot.lane.b32.xlu0 %v1126, 32
        %v1368 = vpop.permute.xlu0 %1367
        %1369 = vrot.lane.b32.xlu0 %v1128, 32
        %v1370 = vpop.permute.xlu0 %1369
        %1375 = vrot.lane.b32.xlu0 %v1361, 40
        %v1376 = vpop.permute.xlu0 %1375
        %1377 = vrot.lane.b32.xlu0 %v1363, 40
        %v1378 = vpop.permute.xlu0 %1377
        %v1381 = vsel %vm751, %v1088, %v1368
        %v1382 = vsel %vm751, %v1090, %v1370
        %vm1383 = vcmask 326656
        %v1384 = vsel %vm1383, %v1381, %v1376
        %v1385 = vsel %vm1383, %v1382, %v1378
        %1386 = vst.msk [vmem:[%s668 + $0x8] sm:$0xff] %vm710, %v1384
        %vm1387 = vcmask 385024
        %1388 = vst.msk [vmem:[%s668 + $0x18] sm:$0x1] %vm1387, %v1385
        %s1389 = sand.u32 %s469, 1
        %s1390 = scalar_lea.sflag [#allocation4], %s1389
        %s1391 = sand.u32 %s469, 1
        %s1392 = smul.addr %s1391, 32
        %s1393 = scalar_lea.vmem [#allocation8], %s1392
        // Predicated region
        $region113: #{tpu_custom_call.1} parent=99 // pred_check
          %p1394 = pneg %p479
        $region114: #{tpu_custom_call.1} parent=99 // pred_check_branch
          %1396 = sbr.rel (%p1394) target = $region116
        $region115: #{tpu_custom_call.1} parent=99 // pred_region
          %1398 = vsyncadd %s1390, 0
          %s1399 = smul.addr %s36, 4
          %s1400 = smul.addr %s1399, 8
          %s1401 = scalar_lea.hbm %s20, %s1400
          %s1402 = sshll.u32 %s1393, 4
          %s1403 = int_to_ptr.vmem [resolvable:$true] %s1402
          %s1404 = sshll.u32 %s1401, 4
          %s1405 = int_to_ptr.hbm [resolvable:$true] %s1404
          %1410 = dma.vmem_to_hbm [thread:$0]  %s1403, 512, %s1405, %s1390, 256, 256, 16
        $region116: #{tpu_custom_call.1} parent=99 // pred_fallthru
          _
      $region100: #{tpu_custom_call.1} parent=5 // pred_fallthru
        _
      %p1411 = scmp.le.s32.totalorder 2, %s31
      // Predicated region
      $region117: #{tpu_custom_call.1} parent=5 // pred_check
        %p1412 = pneg %p1411
      $region118: #{tpu_custom_call.1} parent=5 // pred_check_branch
        %1414 = sbr.rel (%p1412) target = $region120
      $region119: #{tpu_custom_call.1} parent=5 // pred_region
        %s1415 = ssub.s32 %s31, 2
        // Predicated region
        $region121: #{tpu_custom_call.1} parent=119 // pred_check
          %p1416 = pneg %p485
        $region122: #{tpu_custom_call.1} parent=119 // pred_check_branch
          %1418 = sbr.rel (%p1416) target = $region124
        $region123: #{tpu_custom_call.1} parent=119 // pred_region
          %s1419 = sand.u32 %s470, 1
          %s1420 = scalar_lea.sflag [#allocation4], %s1419
          %s1421 = sand.u32 %s470, 1
          %s1422 = smul.addr %s1421, 32
          %s1423 = scalar_lea.vmem [#allocation8], %s1422
          %1425 = dma.done %s1420, 512
        $region124: #{tpu_custom_call.1} parent=119 // pred_fallthru
          _
      $region120: #{tpu_custom_call.1} parent=5 // pred_fallthru
        _
    $region6: #{tpu_custom_call.1} parent=1 // loop_footer
      %s35 = sadd.s32 1, %s31
    $region7: #{tpu_custom_call.1} parent=1 // loop_footer_branch
      %30 = sbr.rel target = $region3
    $region8: #{tpu_custom_call.1} parent=1 // loop_exit
      _
    %1426 = vsyncpa [#allocation3], 1
    %s1427 = scalar_lea.sflag [#allocation3], 1
    %1428 = vsyncpa %s1427, 1
    %1429 = vsyncpa [#allocation6], 1
    %1430 = vsyncpa [#allocation4], 1
    %s1431 = scalar_lea.sflag [#allocation4], 1
    %1432 = vsyncpa %s1431, 1

</llo_original>
